<compile_context>
chip_gen: v6e
topology: v6e:2x2x1
jax: 0.10.0
libtpu: 0.0.40
codegen_flags: <defaults>
</compile_context>

<pallas_src>
import math
import numpy as np

import jax
import jax.numpy as jnp
from jax.experimental import pallas as pl
from jax.experimental.pallas import tpu as pltpu

# ----------------------------- config ---------------------------------------
STATE_DIM = 16
ACTION_DIM = 8
HIDDEN = 32
BATCH = 8
N_TIMESTEPS = 8          # small for the demo (module default is 100)
EPS = 0.002
MIN_T = 2.0
MAX_T = 80.0
MAX_ACTION = 1.0
ACTION_NORM = False      # module default

# ------------------- static timestep schedule (compile-time) -----------------
_TS = np.linspace(MIN_T, MAX_T, N_TIMESTEPS)[::-1].copy()            # reversed t_seq
_C_SKIP = (0.25 / ((_TS - EPS) ** 2 + 0.25)).astype(np.float32)      # c_skip(t)
_C_OUT = (0.5 * (_TS - EPS) / np.sqrt(_TS ** 2 + 0.25)).astype(np.float32)
_NSCALE = np.sqrt(_TS ** 2 - EPS ** 2).astype(np.float32)            # sqrt(t^2 - eps^2)
_TS_F32 = _TS.astype(np.float32)

# ---------------- packed weight buffer layout (8-row-aligned) -----------------
_PACK_W = 128                                    # lane-dense column width
R_W1A = 0                                        # (ACTION_DIM, HIDDEN)
R_W1S = 8                                        # (STATE_DIM, HIDDEN)
R_W2 = 24                                        # (HIDDEN, HIDDEN)
R_W3 = 56                                        # (HIDDEN, ACTION_DIM)
R_B2 = 88                                        # (1, HIDDEN)
R_B3 = 96                                        # (1, ACTION_DIM)
R_TB = 104                                       # (N_TIMESTEPS, HIDDEN): b1 + t_i * w1t
R_TOTAL = R_TB + ((N_TIMESTEPS + 7) // 8) * 8    # 112 rows for N=8


def _mish_fast(x):
    # mish(x) = x * tanh(softplus(x)) = x * ((1+e^x)^2 - 1) / ((1+e^x)^2 + 1)
    # one exp + one approx EUP reciprocal instead of log1p + exp + tanh.
    e = jnp.exp(jnp.minimum(x, 20.0))
    n = (1.0 + e) * (1.0 + e)
    return x * (n - 1.0) * pl.reciprocal(n + 1.0, approx=True)


# --------------------------- fused Pallas kernel ------------------------------
def consistency_sample_kernel(state_ref, noise_ref, w_ref, out_ref):
    # static sub-views / loads of the packed weight buffer (zero runtime indexing cost)
    w1a = w_ref[R_W1A:R_W1A + ACTION_DIM, :HIDDEN]         # (A, H)
    w1s = w_ref[R_W1S:R_W1S + STATE_DIM, :HIDDEN]          # (S, H)
    w2 = w_ref[R_W2:R_W2 + HIDDEN, :HIDDEN]                # (H, H)
    w3 = w_ref[R_W3:R_W3 + HIDDEN, :ACTION_DIM]            # (H, A)
    b2 = w_ref[R_B2:R_B2 + 1, :HIDDEN]                     # (1, H)
    b3 = w_ref[R_B3:R_B3 + 1, :ACTION_DIM]                 # (1, A)

    # loop-invariant: state part of the folded-concat first layer (bias folded into tbias)
    state_proj = jnp.dot(state_ref[...], w1s, preferred_element_type=jnp.float32)   # (B, H)

    # initial action = randn * max_T
    action = noise_ref[0] * MAX_T
    if ACTION_NORM:
        action = MAX_ACTION * jnp.tanh(action)

    # Fully unrolled static schedule: per-step coefficients are immediates, the per-step
    # t-bias row lives in the packed buffer.  (At N_TIMESTEPS=100 switch this to a
    # lax.fori_loop with partial unroll + SMEM schedule tables.)
    for i in range(N_TIMESTEPS):
        c_skip = float(_C_SKIP[i])
        c_out = float(_C_OUT[i])
        if i > 0:
            action = action + float(_NSCALE[i]) * noise_ref[i]
            if ACTION_NORM:
                action = MAX_ACTION * jnp.tanh(action)

        tbias = w_ref[R_TB + i:R_TB + i + 1, :HIDDEN]      # (1, H) = b1 + t_i * w1t
        h = jnp.dot(action, w1a, preferred_element_type=jnp.float32) + state_proj + tbias
        h = _mish_fast(h)
        h = jnp.dot(h, w2, preferred_element_type=jnp.float32) + b2
        h = _mish_fast(h)
        model_out = jnp.dot(h, w3, preferred_element_type=jnp.float32) + b3

        action = c_skip * action + c_out * model_out
        if ACTION_NORM:
            action = MAX_ACTION * jnp.tanh(action)

    # final clamp applied exactly once, matching the reference sample()
    out_ref[...] = jnp.clip(action, -MAX_ACTION, MAX_ACTION).astype(out_ref.dtype)


def _build_sampler(batch, action_dim):
    vmem = pl.BlockSpec(memory_space=pltpu.MemorySpace.VMEM)
    return pl.pallas_call(
        consistency_sample_kernel,
        out_shape=jax.ShapeDtypeStruct((batch, action_dim), jnp.float32),
        in_specs=[vmem, vmem, vmem],          # state, noise, packed weights
        out_specs=vmem,
        compiler_params=pltpu.CompilerParams(vmem_limit_bytes=2 * 1024 * 1024),
    )


@jax.jit
def consistency_forward(state, packed_weights, noise):
    """Equivalent of Consistency.forward(state) -> sample(state); one fused kernel launch."""
    sampler = _build_sampler(state.shape[0], ACTION_DIM)
    return sampler(state, noise, packed_weights)


# ----------------------- host-side weight packing -----------------------------
def pack_params(params):
    """Pack all weights/biases + the folded (b1 + t_i*w1t) table into one (R_TOTAL, 128) buffer."""
    w1a, w1t, w1s, b1, w2, b2, w3, b3 = params
    tbias = b1 + _TS_F32[:, None] * w1t                          # (N_TIMESTEPS, HIDDEN)
    buf = jnp.zeros((R_TOTAL, _PACK_W), jnp.float32)
    buf = buf.at[R_W1A:R_W1A + ACTION_DIM, :HIDDEN].set(w1a)
    buf = buf.at[R_W1S:R_W1S + STATE_DIM, :HIDDEN].set(w1s)
    buf = buf.at[R_W2:R_W2 + HIDDEN, :HIDDEN].set(w2)
    buf = buf.at[R_W3:R_W3 + HIDDEN, :ACTION_DIM].set(w3)
    buf = buf.at[R_B2:R_B2 + 1, :HIDDEN].set(b2)
    buf = buf.at[R_B3:R_B3 + 1, :ACTION_DIM].set(b3)
    buf = buf.at[R_TB:R_TB + N_TIMESTEPS, :HIDDEN].set(tbias)
    return buf


# ------------------------- pure-JAX reference (checking) ----------------------
def _mish_ref(x):
    return x * jnp.tanh(jax.nn.softplus(x))


def consistency_forward_ref(state, params, noise):
    w1a, w1t, w1s, b1, w2, b2, w3, b3 = params
    w1 = jnp.concatenate([w1a, w1t, w1s], axis=0)            # concat([action, t, state]) ordering
    hi = jax.lax.Precision.HIGHEST

    def mlp(action, t):
        tcol = jnp.full((action.shape[0], 1), t, jnp.float32)
        x = jnp.concatenate([action, tcol, state], axis=1)
        h = _mish_ref(jnp.dot(x, w1, precision=hi) + b1)
        h = _mish_ref(jnp.dot(h, w2, precision=hi) + b2)
        return jnp.dot(h, w3, precision=hi) + b3

    def predict(action, t):
        m = mlp(action, t)
        t_ = t - EPS
        c_skip = 0.25 / (t_ * t_ + 0.25)
        c_out = 0.5 * t_ / math.sqrt(t * t + 0.25)
        out = c_skip * action + c_out * m
        if ACTION_NORM:
            out = MAX_ACTION * jnp.tanh(out)
        return out

    action = noise[0] * MAX_T
    if ACTION_NORM:
        action = MAX_ACTION * jnp.tanh(action)
    action = predict(action, float(_TS[0]))
    for i in range(1, N_TIMESTEPS):
        action = action + float(_NSCALE[i]) * noise[i]
        if ACTION_NORM:
            action = MAX_ACTION * jnp.tanh(action)
        action = predict(action, float(_TS[i]))
    return jnp.clip(action, -MAX_ACTION, MAX_ACTION)


# ------------------------- deterministic params ------------------------------
def init_params(key):
    in_dim = ACTION_DIM + 1 + STATE_DIM
    ks = jax.random.split(key, 4)

    def glorot(k, shape):
        fan_in, fan_out = shape
        lim = math.sqrt(6.0 / (fan_in + fan_out))
        return jax.random.uniform(k, shape, jnp.float32, -lim, lim)

    w1 = glorot(ks[0], (in_dim, HIDDEN))
    w1a = w1[:ACTION_DIM, :]                         # (A, H)
    w1t = w1[ACTION_DIM:ACTION_DIM + 1, :]           # (1, H)
    w1s = w1[ACTION_DIM + 1:, :]                     # (S, H)
    b1 = jnp.zeros((1, HIDDEN), jnp.float32)
    w2 = glorot(ks[1], (HIDDEN, HIDDEN))
    b2 = jnp.zeros((1, HIDDEN), jnp.float32)
    w3 = glorot(ks[2], (HIDDEN, ACTION_DIM))
    b3 = jnp.zeros((1, ACTION_DIM), jnp.float32)
    return (w1a, w1t, w1s, b1, w2, b2, w3, b3)


# --------------------------------- main ---------------------------------------
if __name__ == "__main__":
    root = jax.random.PRNGKey(0)
    k_state, k_params, k_noise = jax.random.split(root, 3)

    state = jax.random.normal(k_state, (BATCH, STATE_DIM), dtype=jnp.float32)
    params = init_params(k_params)
    packed = pack_params(params)
    # noise[0] -> initial action draw; noise[1:] -> per-step z (same distribution as the reference)
    # TODO(synk): optional in-kernel PRNG (pltpu.prng_seed/stateful_normal) would drop this operand
    #             but changes the random stream vs the pure-JAX reference.
    noise = jax.random.normal(k_noise, (N_TIMESTEPS, BATCH, ACTION_DIM), dtype=jnp.float32)

    action = consistency_forward(state, packed, noise)
    action = jax.block_until_ready(action)

    assert action.shape == (BATCH, ACTION_DIM)
    assert bool(jnp.all(jnp.isfinite(action)))
    assert bool(jnp.all(jnp.abs(action) <= MAX_ACTION + 1e-6))

    ref = consistency_forward_ref(state, params, noise)
    np.testing.assert_allclose(np.asarray(action), np.asarray(ref), rtol=1e-2, atol=1e-2)

    print("KERNEL_OK")
</pallas_src>

<mosaic_0001>
module attributes {stable_mosaic.version = 11 : i64} {
  func.func @consistency_sample_kernel(%arg0: memref<8x16xf32, #tpu.memory_space<vmem>>, %arg1: memref<8x8x8xf32, #tpu.memory_space<vmem>>, %arg2: memref<112x128xf32, #tpu.memory_space<vmem>>, %arg3: memref<8x8xf32, #tpu.memory_space<vmem>>) attributes {dimension_semantics = [], scalar_prefetch = 0 : i64, scratch_operands = 0 : i64, tpu.core_type = #tpu.core_type<tc>} {
    %c0 = arith.constant 0 : index
    %c0_0 = arith.constant 0 : index
    %0 = vector.load %arg2[%c0, %c0_0] : memref<112x128xf32, #tpu.memory_space<vmem>>, vector<8x32xf32>
    %c8 = arith.constant 8 : index
    %c0_1 = arith.constant 0 : index
    %1 = vector.load %arg2[%c8, %c0_1] : memref<112x128xf32, #tpu.memory_space<vmem>>, vector<16x32xf32>
    %c24 = arith.constant 24 : index
    %c0_2 = arith.constant 0 : index
    %2 = vector.load %arg2[%c24, %c0_2] : memref<112x128xf32, #tpu.memory_space<vmem>>, vector<32x32xf32>
    %c56 = arith.constant 56 : index
    %c0_3 = arith.constant 0 : index
    %3 = vector.load %arg2[%c56, %c0_3] : memref<112x128xf32, #tpu.memory_space<vmem>>, vector<32x8xf32>
    %c88 = arith.constant 88 : index
    %c0_4 = arith.constant 0 : index
    %4 = vector.load %arg2[%c88, %c0_4] : memref<112x128xf32, #tpu.memory_space<vmem>>, vector<1x32xf32>
    %c96 = arith.constant 96 : index
    %c0_5 = arith.constant 0 : index
    %5 = vector.load %arg2[%c96, %c0_5] : memref<112x128xf32, #tpu.memory_space<vmem>>, vector<1x8xf32>
    %c0_6 = arith.constant 0 : index
    %c0_7 = arith.constant 0 : index
    %6 = vector.load %arg0[%c0_6, %c0_7] : memref<8x16xf32, #tpu.memory_space<vmem>>, vector<8x16xf32>
    %cst = arith.constant dense<0.000000e+00> : vector<8x32xf32>
    %7 = tpu.matmul %6, %1, %cst {dimension_numbers = #tpu.dot_dimension_numbers<[1], [0], [0], [1], [0, 0, 1, 1], [], []>} : vector<8x16xf32>, vector<16x32xf32>, vector<8x32xf32> -> vector<8x32xf32>
    %c0_8 = arith.constant 0 : index
    %c0_9 = arith.constant 0 : index
    %c0_10 = arith.constant 0 : index
    %8 = vector.load %arg1[%c0_8, %c0_9, %c0_10] : memref<8x8x8xf32, #tpu.memory_space<vmem>>, vector<1x8x8xf32>
    %9 = vector.shape_cast %8 : vector<1x8x8xf32> to vector<8x8xf32>
    %cst_11 = arith.constant 8.000000e+01 : f32
    %10 = vector.broadcast %cst_11 : f32 to vector<8x8xf32>
    %11 = arith.mulf %9, %10 : vector<8x8xf32>
    %c104 = arith.constant 104 : index
    %c0_12 = arith.constant 0 : index
    %12 = vector.load %arg2[%c104, %c0_12] : memref<112x128xf32, #tpu.memory_space<vmem>>, vector<1x32xf32>
    %cst_13 = arith.constant dense<0.000000e+00> : vector<8x32xf32>
    %13 = tpu.matmul %11, %0, %cst_13 {dimension_numbers = #tpu.dot_dimension_numbers<[1], [0], [0], [1], [0, 0, 1, 1], [], []>} : vector<8x8xf32>, vector<8x32xf32>, vector<8x32xf32> -> vector<8x32xf32>
    %14 = arith.addf %13, %7 : vector<8x32xf32>
    %15 = vector.broadcast %12 : vector<1x32xf32> to vector<8x32xf32>
    %16 = arith.addf %14, %15 : vector<8x32xf32>
    %cst_14 = arith.constant 2.000000e+01 : f32
    %17 = vector.broadcast %cst_14 : f32 to vector<8x32xf32>
    %18 = arith.minimumf %16, %17 : vector<8x32xf32>
    %19 = math.exp %18 : vector<8x32xf32>
    %cst_15 = arith.constant 1.000000e+00 : f32
    %20 = vector.broadcast %cst_15 : f32 to vector<8x32xf32>
    %21 = arith.addf %20, %19 : vector<8x32xf32>
    %cst_16 = arith.constant 1.000000e+00 : f32
    %22 = vector.broadcast %cst_16 : f32 to vector<8x32xf32>
    %23 = arith.addf %22, %19 : vector<8x32xf32>
    %24 = arith.mulf %21, %23 : vector<8x32xf32>
    %cst_17 = arith.constant 1.000000e+00 : f32
    %25 = vector.broadcast %cst_17 : f32 to vector<8x32xf32>
    %26 = arith.subf %24, %25 : vector<8x32xf32>
    %27 = arith.mulf %16, %26 : vector<8x32xf32>
    %cst_18 = arith.constant 1.000000e+00 : f32
    %28 = vector.broadcast %cst_18 : f32 to vector<8x32xf32>
    %29 = arith.addf %24, %28 : vector<8x32xf32>
    %30 = tpu.reciprocal %29 {approx = true} : vector<8x32xf32> -> vector<8x32xf32>
    %31 = arith.mulf %27, %30 : vector<8x32xf32>
    %cst_19 = arith.constant dense<0.000000e+00> : vector<8x32xf32>
    %32 = tpu.matmul %31, %2, %cst_19 {dimension_numbers = #tpu.dot_dimension_numbers<[1], [0], [0], [1], [0, 0, 1, 1], [], []>} : vector<8x32xf32>, vector<32x32xf32>, vector<8x32xf32> -> vector<8x32xf32>
    %33 = vector.broadcast %4 : vector<1x32xf32> to vector<8x32xf32>
    %34 = arith.addf %32, %33 : vector<8x32xf32>
    %cst_20 = arith.constant 2.000000e+01 : f32
    %35 = vector.broadcast %cst_20 : f32 to vector<8x32xf32>
    %36 = arith.minimumf %34, %35 : vector<8x32xf32>
    %37 = math.exp %36 : vector<8x32xf32>
    %cst_21 = arith.constant 1.000000e+00 : f32
    %38 = vector.broadcast %cst_21 : f32 to vector<8x32xf32>
    %39 = arith.addf %38, %37 : vector<8x32xf32>
    %cst_22 = arith.constant 1.000000e+00 : f32
    %40 = vector.broadcast %cst_22 : f32 to vector<8x32xf32>
    %41 = arith.addf %40, %37 : vector<8x32xf32>
    %42 = arith.mulf %39, %41 : vector<8x32xf32>
    %cst_23 = arith.constant 1.000000e+00 : f32
    %43 = vector.broadcast %cst_23 : f32 to vector<8x32xf32>
    %44 = arith.subf %42, %43 : vector<8x32xf32>
    %45 = arith.mulf %34, %44 : vector<8x32xf32>
    %cst_24 = arith.constant 1.000000e+00 : f32
    %46 = vector.broadcast %cst_24 : f32 to vector<8x32xf32>
    %47 = arith.addf %42, %46 : vector<8x32xf32>
    %48 = tpu.reciprocal %47 {approx = true} : vector<8x32xf32> -> vector<8x32xf32>
    %49 = arith.mulf %45, %48 : vector<8x32xf32>
    %cst_25 = arith.constant dense<0.000000e+00> : vector<8x8xf32>
    %50 = tpu.matmul %49, %3, %cst_25 {dimension_numbers = #tpu.dot_dimension_numbers<[1], [0], [0], [1], [0, 0, 1, 1], [], []>} : vector<8x32xf32>, vector<32x8xf32>, vector<8x8xf32> -> vector<8x8xf32>
    %51 = vector.broadcast %5 : vector<1x8xf32> to vector<8x8xf32>
    %52 = arith.addf %50, %51 : vector<8x8xf32>
    %cst_26 = arith.constant 3.90629284E-5 : f32
    %53 = vector.broadcast %cst_26 : f32 to vector<8x8xf32>
    %54 = arith.mulf %53, %11 : vector<8x8xf32>
    %cst_27 = arith.constant 0.499977738 : f32
    %55 = vector.broadcast %cst_27 : f32 to vector<8x8xf32>
    %56 = arith.mulf %55, %52 : vector<8x8xf32>
    %57 = arith.addf %54, %56 : vector<8x8xf32>
    %c1 = arith.constant 1 : index
    %c0_28 = arith.constant 0 : index
    %c0_29 = arith.constant 0 : index
    %58 = vector.load %arg1[%c1, %c0_28, %c0_29] : memref<8x8x8xf32, #tpu.memory_space<vmem>>, vector<1x8x8xf32>
    %59 = vector.shape_cast %58 : vector<1x8x8xf32> to vector<8x8xf32>
    %cst_30 = arith.constant 68.8571396 : f32
    %60 = vector.broadcast %cst_30 : f32 to vector<8x8xf32>
    %61 = arith.mulf %60, %59 : vector<8x8xf32>
    %62 = arith.addf %57, %61 : vector<8x8xf32>
    %c105 = arith.constant 105 : index
    %c0_31 = arith.constant 0 : index
    %63 = vector.load %arg2[%c105, %c0_31] : memref<112x128xf32, #tpu.memory_space<vmem>>, vector<1x32xf32>
    %cst_32 = arith.constant dense<0.000000e+00> : vector<8x32xf32>
    %64 = tpu.matmul %62, %0, %cst_32 {dimension_numbers = #tpu.dot_dimension_numbers<[1], [0], [0], [1], [0, 0, 1, 1], [], []>} : vector<8x8xf32>, vector<8x32xf32>, vector<8x32xf32> -> vector<8x32xf32>
    %65 = arith.addf %64, %7 : vector<8x32xf32>
    %66 = vector.broadcast %63 : vector<1x32xf32> to vector<8x32xf32>
    %67 = arith.addf %65, %66 : vector<8x32xf32>
    %cst_33 = arith.constant 2.000000e+01 : f32
    %68 = vector.broadcast %cst_33 : f32 to vector<8x32xf32>
    %69 = arith.minimumf %67, %68 : vector<8x32xf32>
    %70 = math.exp %69 : vector<8x32xf32>
    %cst_34 = arith.constant 1.000000e+00 : f32
    %71 = vector.broadcast %cst_34 : f32 to vector<8x32xf32>
    %72 = arith.addf %71, %70 : vector<8x32xf32>
    %cst_35 = arith.constant 1.000000e+00 : f32
    %73 = vector.broadcast %cst_35 : f32 to vector<8x32xf32>
    %74 = arith.addf %73, %70 : vector<8x32xf32>
    %75 = arith.mulf %72, %74 : vector<8x32xf32>
    %cst_36 = arith.constant 1.000000e+00 : f32
    %76 = vector.broadcast %cst_36 : f32 to vector<8x32xf32>
    %77 = arith.subf %75, %76 : vector<8x32xf32>
    %78 = arith.mulf %67, %77 : vector<8x32xf32>
    %cst_37 = arith.constant 1.000000e+00 : f32
    %79 = vector.broadcast %cst_37 : f32 to vector<8x32xf32>
    %80 = arith.addf %75, %79 : vector<8x32xf32>
    %81 = tpu.reciprocal %80 {approx = true} : vector<8x32xf32> -> vector<8x32xf32>
    %82 = arith.mulf %78, %81 : vector<8x32xf32>
    %cst_38 = arith.constant dense<0.000000e+00> : vector<8x32xf32>
    %83 = tpu.matmul %82, %2, %cst_38 {dimension_numbers = #tpu.dot_dimension_numbers<[1], [0], [0], [1], [0, 0, 1, 1], [], []>} : vector<8x32xf32>, vector<32x32xf32>, vector<8x32xf32> -> vector<8x32xf32>
    %84 = vector.broadcast %4 : vector<1x32xf32> to vector<8x32xf32>
    %85 = arith.addf %83, %84 : vector<8x32xf32>
    %cst_39 = arith.constant 2.000000e+01 : f32
    %86 = vector.broadcast %cst_39 : f32 to vector<8x32xf32>
    %87 = arith.minimumf %85, %86 : vector<8x32xf32>
    %88 = math.exp %87 : vector<8x32xf32>
    %cst_40 = arith.constant 1.000000e+00 : f32
    %89 = vector.broadcast %cst_40 : f32 to vector<8x32xf32>
    %90 = arith.addf %89, %88 : vector<8x32xf32>
    %cst_41 = arith.constant 1.000000e+00 : f32
    %91 = vector.broadcast %cst_41 : f32 to vector<8x32xf32>
    %92 = arith.addf %91, %88 : vector<8x32xf32>
    %93 = arith.mulf %90, %92 : vector<8x32xf32>
    %cst_42 = arith.constant 1.000000e+00 : f32
    %94 = vector.broadcast %cst_42 : f32 to vector<8x32xf32>
    %95 = arith.subf %93, %94 : vector<8x32xf32>
    %96 = arith.mulf %85, %95 : vector<8x32xf32>
    %cst_43 = arith.constant 1.000000e+00 : f32
    %97 = vector.broadcast %cst_43 : f32 to vector<8x32xf32>
    %98 = arith.addf %93, %97 : vector<8x32xf32>
    %99 = tpu.reciprocal %98 {approx = true} : vector<8x32xf32> -> vector<8x32xf32>
    %100 = arith.mulf %96, %99 : vector<8x32xf32>
    %cst_44 = arith.constant dense<0.000000e+00> : vector<8x8xf32>
    %101 = tpu.matmul %100, %3, %cst_44 {dimension_numbers = #tpu.dot_dimension_numbers<[1], [0], [0], [1], [0, 0, 1, 1], [], []>} : vector<8x32xf32>, vector<32x8xf32>, vector<8x8xf32> -> vector<8x8xf32>
    %102 = vector.broadcast %5 : vector<1x8xf32> to vector<8x8xf32>
    %103 = arith.addf %101, %102 : vector<8x8xf32>
    %cst_45 = arith.constant 5.27283701E-5 : f32
    %104 = vector.broadcast %cst_45 : f32 to vector<8x8xf32>
    %105 = arith.mulf %104, %62 : vector<8x8xf32>
    %cst_46 = arith.constant 0.499972284 : f32
    %106 = vector.broadcast %cst_46 : f32 to vector<8x8xf32>
    %107 = arith.mulf %106, %103 : vector<8x8xf32>
    %108 = arith.addf %105, %107 : vector<8x8xf32>
    %c2 = arith.constant 2 : index
    %c0_47 = arith.constant 0 : index
    %c0_48 = arith.constant 0 : index
    %109 = vector.load %arg1[%c2, %c0_47, %c0_48] : memref<8x8x8xf32, #tpu.memory_space<vmem>>, vector<1x8x8xf32>
    %110 = vector.shape_cast %109 : vector<1x8x8xf32> to vector<8x8xf32>
    %cst_49 = arith.constant 57.7142868 : f32
    %111 = vector.broadcast %cst_49 : f32 to vector<8x8xf32>
    %112 = arith.mulf %111, %110 : vector<8x8xf32>
    %113 = arith.addf %108, %112 : vector<8x8xf32>
    %c106 = arith.constant 106 : index
    %c0_50 = arith.constant 0 : index
    %114 = vector.load %arg2[%c106, %c0_50] : memref<112x128xf32, #tpu.memory_space<vmem>>, vector<1x32xf32>
    %cst_51 = arith.constant dense<0.000000e+00> : vector<8x32xf32>
    %115 = tpu.matmul %113, %0, %cst_51 {dimension_numbers = #tpu.dot_dimension_numbers<[1], [0], [0], [1], [0, 0, 1, 1], [], []>} : vector<8x8xf32>, vector<8x32xf32>, vector<8x32xf32> -> vector<8x32xf32>
    %116 = arith.addf %115, %7 : vector<8x32xf32>
    %117 = vector.broadcast %114 : vector<1x32xf32> to vector<8x32xf32>
    %118 = arith.addf %116, %117 : vector<8x32xf32>
    %cst_52 = arith.constant 2.000000e+01 : f32
    %119 = vector.broadcast %cst_52 : f32 to vector<8x32xf32>
    %120 = arith.minimumf %118, %119 : vector<8x32xf32>
    %121 = math.exp %120 : vector<8x32xf32>
    %cst_53 = arith.constant 1.000000e+00 : f32
    %122 = vector.broadcast %cst_53 : f32 to vector<8x32xf32>
    %123 = arith.addf %122, %121 : vector<8x32xf32>
    %cst_54 = arith.constant 1.000000e+00 : f32
    %124 = vector.broadcast %cst_54 : f32 to vector<8x32xf32>
    %125 = arith.addf %124, %121 : vector<8x32xf32>
    %126 = arith.mulf %123, %125 : vector<8x32xf32>
    %cst_55 = arith.constant 1.000000e+00 : f32
    %127 = vector.broadcast %cst_55 : f32 to vector<8x32xf32>
    %128 = arith.subf %126, %127 : vector<8x32xf32>
    %129 = arith.mulf %118, %128 : vector<8x32xf32>
    %cst_56 = arith.constant 1.000000e+00 : f32
    %130 = vector.broadcast %cst_56 : f32 to vector<8x32xf32>
    %131 = arith.addf %126, %130 : vector<8x32xf32>
    %132 = tpu.reciprocal %131 {approx = true} : vector<8x32xf32> -> vector<8x32xf32>
    %133 = arith.mulf %129, %132 : vector<8x32xf32>
    %cst_57 = arith.constant dense<0.000000e+00> : vector<8x32xf32>
    %134 = tpu.matmul %133, %2, %cst_57 {dimension_numbers = #tpu.dot_dimension_numbers<[1], [0], [0], [1], [0, 0, 1, 1], [], []>} : vector<8x32xf32>, vector<32x32xf32>, vector<8x32xf32> -> vector<8x32xf32>
    %135 = vector.broadcast %4 : vector<1x32xf32> to vector<8x32xf32>
    %136 = arith.addf %134, %135 : vector<8x32xf32>
    %cst_58 = arith.constant 2.000000e+01 : f32
    %137 = vector.broadcast %cst_58 : f32 to vector<8x32xf32>
    %138 = arith.minimumf %136, %137 : vector<8x32xf32>
    %139 = math.exp %138 : vector<8x32xf32>
    %cst_59 = arith.constant 1.000000e+00 : f32
    %140 = vector.broadcast %cst_59 : f32 to vector<8x32xf32>
    %141 = arith.addf %140, %139 : vector<8x32xf32>
    %cst_60 = arith.constant 1.000000e+00 : f32
    %142 = vector.broadcast %cst_60 : f32 to vector<8x32xf32>
    %143 = arith.addf %142, %139 : vector<8x32xf32>
    %144 = arith.mulf %141, %143 : vector<8x32xf32>
    %cst_61 = arith.constant 1.000000e+00 : f32
    %145 = vector.broadcast %cst_61 : f32 to vector<8x32xf32>
    %146 = arith.subf %144, %145 : vector<8x32xf32>
    %147 = arith.mulf %136, %146 : vector<8x32xf32>
    %cst_62 = arith.constant 1.000000e+00 : f32
    %148 = vector.broadcast %cst_62 : f32 to vector<8x32xf32>
    %149 = arith.addf %144, %148 : vector<8x32xf32>
    %150 = tpu.reciprocal %149 {approx = true} : vector<8x32xf32> -> vector<8x32xf32>
    %151 = arith.mulf %147, %150 : vector<8x32xf32>
    %cst_63 = arith.constant dense<0.000000e+00> : vector<8x8xf32>
    %152 = tpu.matmul %151, %3, %cst_63 {dimension_numbers = #tpu.dot_dimension_numbers<[1], [0], [0], [1], [0, 0, 1, 1], [], []>} : vector<8x32xf32>, vector<32x8xf32>, vector<8x8xf32> -> vector<8x8xf32>
    %153 = vector.broadcast %5 : vector<1x8xf32> to vector<8x8xf32>
    %154 = arith.addf %152, %153 : vector<8x8xf32>
    %cst_64 = arith.constant 7.50534818E-5 : f32
    %155 = vector.broadcast %cst_64 : f32 to vector<8x8xf32>
    %156 = arith.mulf %155, %113 : vector<8x8xf32>
    %cst_65 = arith.constant 0.499963909 : f32
    %157 = vector.broadcast %cst_65 : f32 to vector<8x8xf32>
    %158 = arith.mulf %157, %154 : vector<8x8xf32>
    %159 = arith.addf %156, %158 : vector<8x8xf32>
    %c3 = arith.constant 3 : index
    %c0_66 = arith.constant 0 : index
    %c0_67 = arith.constant 0 : index
    %160 = vector.load %arg1[%c3, %c0_66, %c0_67] : memref<8x8x8xf32, #tpu.memory_space<vmem>>, vector<1x8x8xf32>
    %161 = vector.shape_cast %160 : vector<1x8x8xf32> to vector<8x8xf32>
    %cst_68 = arith.constant 46.5714302 : f32
    %162 = vector.broadcast %cst_68 : f32 to vector<8x8xf32>
    %163 = arith.mulf %162, %161 : vector<8x8xf32>
    %164 = arith.addf %159, %163 : vector<8x8xf32>
    %c107 = arith.constant 107 : index
    %c0_69 = arith.constant 0 : index
    %165 = vector.load %arg2[%c107, %c0_69] : memref<112x128xf32, #tpu.memory_space<vmem>>, vector<1x32xf32>
    %cst_70 = arith.constant dense<0.000000e+00> : vector<8x32xf32>
    %166 = tpu.matmul %164, %0, %cst_70 {dimension_numbers = #tpu.dot_dimension_numbers<[1], [0], [0], [1], [0, 0, 1, 1], [], []>} : vector<8x8xf32>, vector<8x32xf32>, vector<8x32xf32> -> vector<8x32xf32>
    %167 = arith.addf %166, %7 : vector<8x32xf32>
    %168 = vector.broadcast %165 : vector<1x32xf32> to vector<8x32xf32>
    %169 = arith.addf %167, %168 : vector<8x32xf32>
    %cst_71 = arith.constant 2.000000e+01 : f32
    %170 = vector.broadcast %cst_71 : f32 to vector<8x32xf32>
    %171 = arith.minimumf %169, %170 : vector<8x32xf32>
    %172 = math.exp %171 : vector<8x32xf32>
    %cst_72 = arith.constant 1.000000e+00 : f32
    %173 = vector.broadcast %cst_72 : f32 to vector<8x32xf32>
    %174 = arith.addf %173, %172 : vector<8x32xf32>
    %cst_73 = arith.constant 1.000000e+00 : f32
    %175 = vector.broadcast %cst_73 : f32 to vector<8x32xf32>
    %176 = arith.addf %175, %172 : vector<8x32xf32>
    %177 = arith.mulf %174, %176 : vector<8x32xf32>
    %cst_74 = arith.constant 1.000000e+00 : f32
    %178 = vector.broadcast %cst_74 : f32 to vector<8x32xf32>
    %179 = arith.subf %177, %178 : vector<8x32xf32>
    %180 = arith.mulf %169, %179 : vector<8x32xf32>
    %cst_75 = arith.constant 1.000000e+00 : f32
    %181 = vector.broadcast %cst_75 : f32 to vector<8x32xf32>
    %182 = arith.addf %177, %181 : vector<8x32xf32>
    %183 = tpu.reciprocal %182 {approx = true} : vector<8x32xf32> -> vector<8x32xf32>
    %184 = arith.mulf %180, %183 : vector<8x32xf32>
    %cst_76 = arith.constant dense<0.000000e+00> : vector<8x32xf32>
    %185 = tpu.matmul %184, %2, %cst_76 {dimension_numbers = #tpu.dot_dimension_numbers<[1], [0], [0], [1], [0, 0, 1, 1], [], []>} : vector<8x32xf32>, vector<32x32xf32>, vector<8x32xf32> -> vector<8x32xf32>
    %186 = vector.broadcast %4 : vector<1x32xf32> to vector<8x32xf32>
    %187 = arith.addf %185, %186 : vector<8x32xf32>
    %cst_77 = arith.constant 2.000000e+01 : f32
    %188 = vector.broadcast %cst_77 : f32 to vector<8x32xf32>
    %189 = arith.minimumf %187, %188 : vector<8x32xf32>
    %190 = math.exp %189 : vector<8x32xf32>
    %cst_78 = arith.constant 1.000000e+00 : f32
    %191 = vector.broadcast %cst_78 : f32 to vector<8x32xf32>
    %192 = arith.addf %191, %190 : vector<8x32xf32>
    %cst_79 = arith.constant 1.000000e+00 : f32
    %193 = vector.broadcast %cst_79 : f32 to vector<8x32xf32>
    %194 = arith.addf %193, %190 : vector<8x32xf32>
    %195 = arith.mulf %192, %194 : vector<8x32xf32>
    %cst_80 = arith.constant 1.000000e+00 : f32
    %196 = vector.broadcast %cst_80 : f32 to vector<8x32xf32>
    %197 = arith.subf %195, %196 : vector<8x32xf32>
    %198 = arith.mulf %187, %197 : vector<8x32xf32>
    %cst_81 = arith.constant 1.000000e+00 : f32
    %199 = vector.broadcast %cst_81 : f32 to vector<8x32xf32>
    %200 = arith.addf %195, %199 : vector<8x32xf32>
    %201 = tpu.reciprocal %200 {approx = true} : vector<8x32xf32> -> vector<8x32xf32>
    %202 = arith.mulf %198, %201 : vector<8x32xf32>
    %cst_82 = arith.constant dense<0.000000e+00> : vector<8x8xf32>
    %203 = tpu.matmul %202, %3, %cst_82 {dimension_numbers = #tpu.dot_dimension_numbers<[1], [0], [0], [1], [0, 0, 1, 1], [], []>} : vector<8x32xf32>, vector<32x8xf32>, vector<8x8xf32> -> vector<8x8xf32>
    %204 = vector.broadcast %5 : vector<1x8xf32> to vector<8x8xf32>
    %205 = arith.addf %203, %204 : vector<8x8xf32>
    %cst_83 = arith.constant 1.15262526E-4 : f32
    %206 = vector.broadcast %cst_83 : f32 to vector<8x8xf32>
    %207 = arith.mulf %206, %164 : vector<8x8xf32>
    %cst_84 = arith.constant 0.499949723 : f32
    %208 = vector.broadcast %cst_84 : f32 to vector<8x8xf32>
    %209 = arith.mulf %208, %205 : vector<8x8xf32>
    %210 = arith.addf %207, %209 : vector<8x8xf32>
    %c4 = arith.constant 4 : index
    %c0_85 = arith.constant 0 : index
    %c0_86 = arith.constant 0 : index
    %211 = vector.load %arg1[%c4, %c0_85, %c0_86] : memref<8x8x8xf32, #tpu.memory_space<vmem>>, vector<1x8x8xf32>
    %212 = vector.shape_cast %211 : vector<1x8x8xf32> to vector<8x8xf32>
    %cst_87 = arith.constant 35.4285698 : f32
    %213 = vector.broadcast %cst_87 : f32 to vector<8x8xf32>
    %214 = arith.mulf %213, %212 : vector<8x8xf32>
    %215 = arith.addf %210, %214 : vector<8x8xf32>
    %c108 = arith.constant 108 : index
    %c0_88 = arith.constant 0 : index
    %216 = vector.load %arg2[%c108, %c0_88] : memref<112x128xf32, #tpu.memory_space<vmem>>, vector<1x32xf32>
    %cst_89 = arith.constant dense<0.000000e+00> : vector<8x32xf32>
    %217 = tpu.matmul %215, %0, %cst_89 {dimension_numbers = #tpu.dot_dimension_numbers<[1], [0], [0], [1], [0, 0, 1, 1], [], []>} : vector<8x8xf32>, vector<8x32xf32>, vector<8x32xf32> -> vector<8x32xf32>
    %218 = arith.addf %217, %7 : vector<8x32xf32>
    %219 = vector.broadcast %216 : vector<1x32xf32> to vector<8x32xf32>
    %220 = arith.addf %218, %219 : vector<8x32xf32>
    %cst_90 = arith.constant 2.000000e+01 : f32
    %221 = vector.broadcast %cst_90 : f32 to vector<8x32xf32>
    %222 = arith.minimumf %220, %221 : vector<8x32xf32>
    %223 = math.exp %222 : vector<8x32xf32>
    %cst_91 = arith.constant 1.000000e+00 : f32
    %224 = vector.broadcast %cst_91 : f32 to vector<8x32xf32>
    %225 = arith.addf %224, %223 : vector<8x32xf32>
    %cst_92 = arith.constant 1.000000e+00 : f32
    %226 = vector.broadcast %cst_92 : f32 to vector<8x32xf32>
    %227 = arith.addf %226, %223 : vector<8x32xf32>
    %228 = arith.mulf %225, %227 : vector<8x32xf32>
    %cst_93 = arith.constant 1.000000e+00 : f32
    %229 = vector.broadcast %cst_93 : f32 to vector<8x32xf32>
    %230 = arith.subf %228, %229 : vector<8x32xf32>
    %231 = arith.mulf %220, %230 : vector<8x32xf32>
    %cst_94 = arith.constant 1.000000e+00 : f32
    %232 = vector.broadcast %cst_94 : f32 to vector<8x32xf32>
    %233 = arith.addf %228, %232 : vector<8x32xf32>
    %234 = tpu.reciprocal %233 {approx = true} : vector<8x32xf32> -> vector<8x32xf32>
    %235 = arith.mulf %231, %234 : vector<8x32xf32>
    %cst_95 = arith.constant dense<0.000000e+00> : vector<8x32xf32>
    %236 = tpu.matmul %235, %2, %cst_95 {dimension_numbers = #tpu.dot_dimension_numbers<[1], [0], [0], [1], [0, 0, 1, 1], [], []>} : vector<8x32xf32>, vector<32x32xf32>, vector<8x32xf32> -> vector<8x32xf32>
    %237 = vector.broadcast %4 : vector<1x32xf32> to vector<8x32xf32>
    %238 = arith.addf %236, %237 : vector<8x32xf32>
    %cst_96 = arith.constant 2.000000e+01 : f32
    %239 = vector.broadcast %cst_96 : f32 to vector<8x32xf32>
    %240 = arith.minimumf %238, %239 : vector<8x32xf32>
    %241 = math.exp %240 : vector<8x32xf32>
    %cst_97 = arith.constant 1.000000e+00 : f32
    %242 = vector.broadcast %cst_97 : f32 to vector<8x32xf32>
    %243 = arith.addf %242, %241 : vector<8x32xf32>
    %cst_98 = arith.constant 1.000000e+00 : f32
    %244 = vector.broadcast %cst_98 : f32 to vector<8x32xf32>
    %245 = arith.addf %244, %241 : vector<8x32xf32>
    %246 = arith.mulf %243, %245 : vector<8x32xf32>
    %cst_99 = arith.constant 1.000000e+00 : f32
    %247 = vector.broadcast %cst_99 : f32 to vector<8x32xf32>
    %248 = arith.subf %246, %247 : vector<8x32xf32>
    %249 = arith.mulf %238, %248 : vector<8x32xf32>
    %cst_100 = arith.constant 1.000000e+00 : f32
    %250 = vector.broadcast %cst_100 : f32 to vector<8x32xf32>
    %251 = arith.addf %246, %250 : vector<8x32xf32>
    %252 = tpu.reciprocal %251 {approx = true} : vector<8x32xf32> -> vector<8x32xf32>
    %253 = arith.mulf %249, %252 : vector<8x32xf32>
    %cst_101 = arith.constant dense<0.000000e+00> : vector<8x8xf32>
    %254 = tpu.matmul %253, %3, %cst_101 {dimension_numbers = #tpu.dot_dimension_numbers<[1], [0], [0], [1], [0, 0, 1, 1], [], []>} : vector<8x32xf32>, vector<32x8xf32>, vector<8x8xf32> -> vector<8x8xf32>
    %255 = vector.broadcast %5 : vector<1x8xf32> to vector<8x8xf32>
    %256 = arith.addf %254, %255 : vector<8x8xf32>
    %cst_102 = arith.constant 1.99156857E-4 : f32
    %257 = vector.broadcast %cst_102 : f32 to vector<8x8xf32>
    %258 = arith.mulf %257, %215 : vector<8x8xf32>
    %cst_103 = arith.constant 0.499921978 : f32
    %259 = vector.broadcast %cst_103 : f32 to vector<8x8xf32>
    %260 = arith.mulf %259, %256 : vector<8x8xf32>
    %261 = arith.addf %258, %260 : vector<8x8xf32>
    %c5 = arith.constant 5 : index
    %c0_104 = arith.constant 0 : index
    %c0_105 = arith.constant 0 : index
    %262 = vector.load %arg1[%c5, %c0_104, %c0_105] : memref<8x8x8xf32, #tpu.memory_space<vmem>>, vector<1x8x8xf32>
    %263 = vector.shape_cast %262 : vector<1x8x8xf32> to vector<8x8xf32>
    %cst_106 = arith.constant 24.2857151 : f32
    %264 = vector.broadcast %cst_106 : f32 to vector<8x8xf32>
    %265 = arith.mulf %264, %263 : vector<8x8xf32>
    %266 = arith.addf %261, %265 : vector<8x8xf32>
    %c109 = arith.constant 109 : index
    %c0_107 = arith.constant 0 : index
    %267 = vector.load %arg2[%c109, %c0_107] : memref<112x128xf32, #tpu.memory_space<vmem>>, vector<1x32xf32>
    %cst_108 = arith.constant dense<0.000000e+00> : vector<8x32xf32>
    %268 = tpu.matmul %266, %0, %cst_108 {dimension_numbers = #tpu.dot_dimension_numbers<[1], [0], [0], [1], [0, 0, 1, 1], [], []>} : vector<8x8xf32>, vector<8x32xf32>, vector<8x32xf32> -> vector<8x32xf32>
    %269 = arith.addf %268, %7 : vector<8x32xf32>
    %270 = vector.broadcast %267 : vector<1x32xf32> to vector<8x32xf32>
    %271 = arith.addf %269, %270 : vector<8x32xf32>
    %cst_109 = arith.constant 2.000000e+01 : f32
    %272 = vector.broadcast %cst_109 : f32 to vector<8x32xf32>
    %273 = arith.minimumf %271, %272 : vector<8x32xf32>
    %274 = math.exp %273 : vector<8x32xf32>
    %cst_110 = arith.constant 1.000000e+00 : f32
    %275 = vector.broadcast %cst_110 : f32 to vector<8x32xf32>
    %276 = arith.addf %275, %274 : vector<8x32xf32>
    %cst_111 = arith.constant 1.000000e+00 : f32
    %277 = vector.broadcast %cst_111 : f32 to vector<8x32xf32>
    %278 = arith.addf %277, %274 : vector<8x32xf32>
    %279 = arith.mulf %276, %278 : vector<8x32xf32>
    %cst_112 = arith.constant 1.000000e+00 : f32
    %280 = vector.broadcast %cst_112 : f32 to vector<8x32xf32>
    %281 = arith.subf %279, %280 : vector<8x32xf32>
    %282 = arith.mulf %271, %281 : vector<8x32xf32>
    %cst_113 = arith.constant 1.000000e+00 : f32
    %283 = vector.broadcast %cst_113 : f32 to vector<8x32xf32>
    %284 = arith.addf %279, %283 : vector<8x32xf32>
    %285 = tpu.reciprocal %284 {approx = true} : vector<8x32xf32> -> vector<8x32xf32>
    %286 = arith.mulf %282, %285 : vector<8x32xf32>
    %cst_114 = arith.constant dense<0.000000e+00> : vector<8x32xf32>
    %287 = tpu.matmul %286, %2, %cst_114 {dimension_numbers = #tpu.dot_dimension_numbers<[1], [0], [0], [1], [0, 0, 1, 1], [], []>} : vector<8x32xf32>, vector<32x32xf32>, vector<8x32xf32> -> vector<8x32xf32>
    %288 = vector.broadcast %4 : vector<1x32xf32> to vector<8x32xf32>
    %289 = arith.addf %287, %288 : vector<8x32xf32>
    %cst_115 = arith.constant 2.000000e+01 : f32
    %290 = vector.broadcast %cst_115 : f32 to vector<8x32xf32>
    %291 = arith.minimumf %289, %290 : vector<8x32xf32>
    %292 = math.exp %291 : vector<8x32xf32>
    %cst_116 = arith.constant 1.000000e+00 : f32
    %293 = vector.broadcast %cst_116 : f32 to vector<8x32xf32>
    %294 = arith.addf %293, %292 : vector<8x32xf32>
    %cst_117 = arith.constant 1.000000e+00 : f32
    %295 = vector.broadcast %cst_117 : f32 to vector<8x32xf32>
    %296 = arith.addf %295, %292 : vector<8x32xf32>
    %297 = arith.mulf %294, %296 : vector<8x32xf32>
    %cst_118 = arith.constant 1.000000e+00 : f32
    %298 = vector.broadcast %cst_118 : f32 to vector<8x32xf32>
    %299 = arith.subf %297, %298 : vector<8x32xf32>
    %300 = arith.mulf %289, %299 : vector<8x32xf32>
    %cst_119 = arith.constant 1.000000e+00 : f32
    %301 = vector.broadcast %cst_119 : f32 to vector<8x32xf32>
    %302 = arith.addf %297, %301 : vector<8x32xf32>
    %303 = tpu.reciprocal %302 {approx = true} : vector<8x32xf32> -> vector<8x32xf32>
    %304 = arith.mulf %300, %303 : vector<8x32xf32>
    %cst_120 = arith.constant dense<0.000000e+00> : vector<8x8xf32>
    %305 = tpu.matmul %304, %3, %cst_120 {dimension_numbers = #tpu.dot_dimension_numbers<[1], [0], [0], [1], [0, 0, 1, 1], [], []>} : vector<8x32xf32>, vector<32x8xf32>, vector<8x8xf32> -> vector<8x8xf32>
    %306 = vector.broadcast %5 : vector<1x8xf32> to vector<8x8xf32>
    %307 = arith.addf %305, %306 : vector<8x8xf32>
    %cst_121 = arith.constant 4.23765596E-4 : f32
    %308 = vector.broadcast %cst_121 : f32 to vector<8x8xf32>
    %309 = arith.mulf %308, %266 : vector<8x8xf32>
    %cst_122 = arith.constant 0.499852896 : f32
    %310 = vector.broadcast %cst_122 : f32 to vector<8x8xf32>
    %311 = arith.mulf %310, %307 : vector<8x8xf32>
    %312 = arith.addf %309, %311 : vector<8x8xf32>
    %c6 = arith.constant 6 : index
    %c0_123 = arith.constant 0 : index
    %c0_124 = arith.constant 0 : index
    %313 = vector.load %arg1[%c6, %c0_123, %c0_124] : memref<8x8x8xf32, #tpu.memory_space<vmem>>, vector<1x8x8xf32>
    %314 = vector.shape_cast %313 : vector<1x8x8xf32> to vector<8x8xf32>
    %cst_125 = arith.constant 13.1428566 : f32
    %315 = vector.broadcast %cst_125 : f32 to vector<8x8xf32>
    %316 = arith.mulf %315, %314 : vector<8x8xf32>
    %317 = arith.addf %312, %316 : vector<8x8xf32>
    %c110 = arith.constant 110 : index
    %c0_126 = arith.constant 0 : index
    %318 = vector.load %arg2[%c110, %c0_126] : memref<112x128xf32, #tpu.memory_space<vmem>>, vector<1x32xf32>
    %cst_127 = arith.constant dense<0.000000e+00> : vector<8x32xf32>
    %319 = tpu.matmul %317, %0, %cst_127 {dimension_numbers = #tpu.dot_dimension_numbers<[1], [0], [0], [1], [0, 0, 1, 1], [], []>} : vector<8x8xf32>, vector<8x32xf32>, vector<8x32xf32> -> vector<8x32xf32>
    %320 = arith.addf %319, %7 : vector<8x32xf32>
    %321 = vector.broadcast %318 : vector<1x32xf32> to vector<8x32xf32>
    %322 = arith.addf %320, %321 : vector<8x32xf32>
    %cst_128 = arith.constant 2.000000e+01 : f32
    %323 = vector.broadcast %cst_128 : f32 to vector<8x32xf32>
    %324 = arith.minimumf %322, %323 : vector<8x32xf32>
    %325 = math.exp %324 : vector<8x32xf32>
    %cst_129 = arith.constant 1.000000e+00 : f32
    %326 = vector.broadcast %cst_129 : f32 to vector<8x32xf32>
    %327 = arith.addf %326, %325 : vector<8x32xf32>
    %cst_130 = arith.constant 1.000000e+00 : f32
    %328 = vector.broadcast %cst_130 : f32 to vector<8x32xf32>
    %329 = arith.addf %328, %325 : vector<8x32xf32>
    %330 = arith.mulf %327, %329 : vector<8x32xf32>
    %cst_131 = arith.constant 1.000000e+00 : f32
    %331 = vector.broadcast %cst_131 : f32 to vector<8x32xf32>
    %332 = arith.subf %330, %331 : vector<8x32xf32>
    %333 = arith.mulf %322, %332 : vector<8x32xf32>
    %cst_132 = arith.constant 1.000000e+00 : f32
    %334 = vector.broadcast %cst_132 : f32 to vector<8x32xf32>
    %335 = arith.addf %330, %334 : vector<8x32xf32>
    %336 = tpu.reciprocal %335 {approx = true} : vector<8x32xf32> -> vector<8x32xf32>
    %337 = arith.mulf %333, %336 : vector<8x32xf32>
    %cst_133 = arith.constant dense<0.000000e+00> : vector<8x32xf32>
    %338 = tpu.matmul %337, %2, %cst_133 {dimension_numbers = #tpu.dot_dimension_numbers<[1], [0], [0], [1], [0, 0, 1, 1], [], []>} : vector<8x32xf32>, vector<32x32xf32>, vector<8x32xf32> -> vector<8x32xf32>
    %339 = vector.broadcast %4 : vector<1x32xf32> to vector<8x32xf32>
    %340 = arith.addf %338, %339 : vector<8x32xf32>
    %cst_134 = arith.constant 2.000000e+01 : f32
    %341 = vector.broadcast %cst_134 : f32 to vector<8x32xf32>
    %342 = arith.minimumf %340, %341 : vector<8x32xf32>
    %343 = math.exp %342 : vector<8x32xf32>
    %cst_135 = arith.constant 1.000000e+00 : f32
    %344 = vector.broadcast %cst_135 : f32 to vector<8x32xf32>
    %345 = arith.addf %344, %343 : vector<8x32xf32>
    %cst_136 = arith.constant 1.000000e+00 : f32
    %346 = vector.broadcast %cst_136 : f32 to vector<8x32xf32>
    %347 = arith.addf %346, %343 : vector<8x32xf32>
    %348 = arith.mulf %345, %347 : vector<8x32xf32>
    %cst_137 = arith.constant 1.000000e+00 : f32
    %349 = vector.broadcast %cst_137 : f32 to vector<8x32xf32>
    %350 = arith.subf %348, %349 : vector<8x32xf32>
    %351 = arith.mulf %340, %350 : vector<8x32xf32>
    %cst_138 = arith.constant 1.000000e+00 : f32
    %352 = vector.broadcast %cst_138 : f32 to vector<8x32xf32>
    %353 = arith.addf %348, %352 : vector<8x32xf32>
    %354 = tpu.reciprocal %353 {approx = true} : vector<8x32xf32> -> vector<8x32xf32>
    %355 = arith.mulf %351, %354 : vector<8x32xf32>
    %cst_139 = arith.constant dense<0.000000e+00> : vector<8x8xf32>
    %356 = tpu.matmul %355, %3, %cst_139 {dimension_numbers = #tpu.dot_dimension_numbers<[1], [0], [0], [1], [0, 0, 1, 1], [], []>} : vector<8x32xf32>, vector<32x8xf32>, vector<8x8xf32> -> vector<8x8xf32>
    %357 = vector.broadcast %5 : vector<1x8xf32> to vector<8x8xf32>
    %358 = arith.addf %356, %357 : vector<8x8xf32>
    %cst_140 = arith.constant 0.00144565385 : f32
    %359 = vector.broadcast %cst_140 : f32 to vector<8x8xf32>
    %360 = arith.mulf %359, %317 : vector<8x8xf32>
    %cst_141 = arith.constant 0.499562532 : f32
    %361 = vector.broadcast %cst_141 : f32 to vector<8x8xf32>
    %362 = arith.mulf %361, %358 : vector<8x8xf32>
    %363 = arith.addf %360, %362 : vector<8x8xf32>
    %c7 = arith.constant 7 : index
    %c0_142 = arith.constant 0 : index
    %c0_143 = arith.constant 0 : index
    %364 = vector.load %arg1[%c7, %c0_142, %c0_143] : memref<8x8x8xf32, #tpu.memory_space<vmem>>, vector<1x8x8xf32>
    %365 = vector.shape_cast %364 : vector<1x8x8xf32> to vector<8x8xf32>
    %cst_144 = arith.constant 1.99999905 : f32
    %366 = vector.broadcast %cst_144 : f32 to vector<8x8xf32>
    %367 = arith.mulf %366, %365 : vector<8x8xf32>
    %368 = arith.addf %363, %367 : vector<8x8xf32>
    %c111 = arith.constant 111 : index
    %c0_145 = arith.constant 0 : index
    %369 = vector.load %arg2[%c111, %c0_145] : memref<112x128xf32, #tpu.memory_space<vmem>>, vector<1x32xf32>
    %cst_146 = arith.constant dense<0.000000e+00> : vector<8x32xf32>
    %370 = tpu.matmul %368, %0, %cst_146 {dimension_numbers = #tpu.dot_dimension_numbers<[1], [0], [0], [1], [0, 0, 1, 1], [], []>} : vector<8x8xf32>, vector<8x32xf32>, vector<8x32xf32> -> vector<8x32xf32>
    %371 = arith.addf %370, %7 : vector<8x32xf32>
    %372 = vector.broadcast %369 : vector<1x32xf32> to vector<8x32xf32>
    %373 = arith.addf %371, %372 : vector<8x32xf32>
    %cst_147 = arith.constant 2.000000e+01 : f32
    %374 = vector.broadcast %cst_147 : f32 to vector<8x32xf32>
    %375 = arith.minimumf %373, %374 : vector<8x32xf32>
    %376 = math.exp %375 : vector<8x32xf32>
    %cst_148 = arith.constant 1.000000e+00 : f32
    %377 = vector.broadcast %cst_148 : f32 to vector<8x32xf32>
    %378 = arith.addf %377, %376 : vector<8x32xf32>
    %cst_149 = arith.constant 1.000000e+00 : f32
    %379 = vector.broadcast %cst_149 : f32 to vector<8x32xf32>
    %380 = arith.addf %379, %376 : vector<8x32xf32>
    %381 = arith.mulf %378, %380 : vector<8x32xf32>
    %cst_150 = arith.constant 1.000000e+00 : f32
    %382 = vector.broadcast %cst_150 : f32 to vector<8x32xf32>
    %383 = arith.subf %381, %382 : vector<8x32xf32>
    %384 = arith.mulf %373, %383 : vector<8x32xf32>
    %cst_151 = arith.constant 1.000000e+00 : f32
    %385 = vector.broadcast %cst_151 : f32 to vector<8x32xf32>
    %386 = arith.addf %381, %385 : vector<8x32xf32>
    %387 = tpu.reciprocal %386 {approx = true} : vector<8x32xf32> -> vector<8x32xf32>
    %388 = arith.mulf %384, %387 : vector<8x32xf32>
    %cst_152 = arith.constant dense<0.000000e+00> : vector<8x32xf32>
    %389 = tpu.matmul %388, %2, %cst_152 {dimension_numbers = #tpu.dot_dimension_numbers<[1], [0], [0], [1], [0, 0, 1, 1], [], []>} : vector<8x32xf32>, vector<32x32xf32>, vector<8x32xf32> -> vector<8x32xf32>
    %390 = vector.broadcast %4 : vector<1x32xf32> to vector<8x32xf32>
    %391 = arith.addf %389, %390 : vector<8x32xf32>
    %cst_153 = arith.constant 2.000000e+01 : f32
    %392 = vector.broadcast %cst_153 : f32 to vector<8x32xf32>
    %393 = arith.minimumf %391, %392 : vector<8x32xf32>
    %394 = math.exp %393 : vector<8x32xf32>
    %cst_154 = arith.constant 1.000000e+00 : f32
    %395 = vector.broadcast %cst_154 : f32 to vector<8x32xf32>
    %396 = arith.addf %395, %394 : vector<8x32xf32>
    %cst_155 = arith.constant 1.000000e+00 : f32
    %397 = vector.broadcast %cst_155 : f32 to vector<8x32xf32>
    %398 = arith.addf %397, %394 : vector<8x32xf32>
    %399 = arith.mulf %396, %398 : vector<8x32xf32>
    %cst_156 = arith.constant 1.000000e+00 : f32
    %400 = vector.broadcast %cst_156 : f32 to vector<8x32xf32>
    %401 = arith.subf %399, %400 : vector<8x32xf32>
    %402 = arith.mulf %391, %401 : vector<8x32xf32>
    %cst_157 = arith.constant 1.000000e+00 : f32
    %403 = vector.broadcast %cst_157 : f32 to vector<8x32xf32>
    %404 = arith.addf %399, %403 : vector<8x32xf32>
    %405 = tpu.reciprocal %404 {approx = true} : vector<8x32xf32> -> vector<8x32xf32>
    %406 = arith.mulf %402, %405 : vector<8x32xf32>
    %cst_158 = arith.constant dense<0.000000e+00> : vector<8x8xf32>
    %407 = tpu.matmul %406, %3, %cst_158 {dimension_numbers = #tpu.dot_dimension_numbers<[1], [0], [0], [1], [0, 0, 1, 1], [], []>} : vector<8x32xf32>, vector<32x8xf32>, vector<8x8xf32> -> vector<8x8xf32>
    %408 = vector.broadcast %5 : vector<1x8xf32> to vector<8x8xf32>
    %409 = arith.addf %407, %408 : vector<8x8xf32>
    %cst_159 = arith.constant 0.0589344092 : f32
    %410 = vector.broadcast %cst_159 : f32 to vector<8x8xf32>
    %411 = arith.mulf %410, %368 : vector<8x8xf32>
    %cst_160 = arith.constant 0.484586179 : f32
    %412 = vector.broadcast %cst_160 : f32 to vector<8x8xf32>
    %413 = arith.mulf %412, %409 : vector<8x8xf32>
    %414 = arith.addf %411, %413 : vector<8x8xf32>
    %cst_161 = arith.constant -1.000000e+00 : f32
    %cst_162 = arith.constant 1.000000e+00 : f32
    %415 = vector.broadcast %cst_161 : f32 to vector<8x8xf32>
    %416 = arith.maximumf %415, %414 : vector<8x8xf32>
    %417 = vector.broadcast %cst_162 : f32 to vector<8x8xf32>
    %418 = arith.minimumf %417, %416 : vector<8x8xf32>
    %c0_163 = arith.constant 0 : index
    %c0_164 = arith.constant 0 : index
    %419 = vector.load %arg3[%c0_163, %c0_164] : memref<8x8xf32, #tpu.memory_space<vmem>>, vector<8x8xf32>
    tpu.vector_store %arg3[%c0_163, %c0_164], %418 {strides = array<i32>} : memref<8x8xf32, #tpu.memory_space<vmem>>, vector<8x8xf32>,
    return
  }
}

</mosaic_0001>

<llo_original>
// kernel: consistency_forward.1
$region0: #{consistency_forward.1}
  #allocation0 [shape = 'u32[]', space=smem, size = 0x4, offset = 0x4, fixed_abs, tag = 'smem constant byte address 0x4 - core index']
  #allocation1 [shape = 'u32[144,128]{1,0:T(1,128)}', space=vmem, size = 0x12000, scoped, tag = 'internal scratch']
  %s0 = inlined_call_operand.hbm [shape: f32[8,16], index: 0, kind: input, shape index: {}]
  %s1 = inlined_call_operand.hbm [shape: f32[8,8,8], index: 1, kind: input, shape index: {}]
  %s2 = inlined_call_operand.hbm [shape: f32[112,128], index: 2, kind: input, shape index: {}]
  %s3 = inlined_call_operand.hbm [shape: f32[8,8], index: 3, kind: output, shape index: {}]
  %s4 = sld [smem:[#allocation0]]
  $region34: #{consistency_forward.1} parent=0
    _
  %s6 = ssub.s32 1, %s4
  %s7 = scalar_select 0, %s6, %s4
  $region1: #{consistency_forward.1} parent=0
    #allocation2 [shape = 'u8[4096]{0}', space=vmem, size = 0x1000, scoped, tag = 'input window, operand 0, single buffered']
    #allocation3 [shape = 's32[1]{0}', space=sflag, size = 0x4, scoped, tag = 'scoped memory for consistency_forward.1']
    #allocation4 [shape = 's32[1]{0}', space=sflag, size = 0x4, scoped, tag = 'scoped memory for consistency_forward.1']
    #allocation5 [shape = 'u8[32768]{0}', space=vmem, size = 0x8000, scoped, tag = 'input window, operand 1, single buffered']
    #allocation6 [shape = 's32[1]{0}', space=sflag, size = 0x4, scoped, tag = 'scoped memory for consistency_forward.1']
    #allocation7 [shape = 'u8[57344]{0}', space=vmem, size = 0xe000, scoped, tag = 'input window, operand 2, single buffered']
    #allocation8 [shape = 'u8[4096]{0}', space=vmem, size = 0x1000, scoped, tag = 'output window, operand 0, single buffered']
    %8 = vsyncpa [#allocation3], 0
    %9 = vsyncpa [#allocation6], 0
    %10 = vsyncpa [#allocation4], 0
    // Predicated region
    $region2: #{consistency_forward.1} parent=1 // pred_check
      _
    $region3: #{consistency_forward.1} parent=1 // pred_check_branch
      %12 = sbr.rel (0) target = $region5
    $region4: #{consistency_forward.1} parent=1 // pred_region
      %s14 = ssub.s32 128, 128
      %15 = vsyncadd [#allocation3], %s14
      %s17 = sshll.u32 [#allocation2], 4
      %s18 = int_to_ptr.vmem [resolvable:$true] %s17
      %20 = dma.hbm_to_vmem [thread:$0]  %s0, 128, %s18, [#allocation3]
    $region5: #{consistency_forward.1} parent=1 // pred_fallthru
      _
    // Predicated region
    $region6: #{consistency_forward.1} parent=1 // pred_check
      _
    $region7: #{consistency_forward.1} parent=1 // pred_check_branch
      %22 = sbr.rel (0) target = $region9
    $region8: #{consistency_forward.1} parent=1 // pred_region
      %s24 = ssub.s32 1024, 1024
      %25 = vsyncadd [#allocation6], %s24
      %s26 = sshll.u32 [#allocation5], 4
      %s27 = int_to_ptr.vmem [resolvable:$true] %s26
      %32 = dma.hbm_to_vmem [thread:$0]  %s1, 1024, %s27, [#allocation6], 128, 128, 8
    $region9: #{consistency_forward.1} parent=1 // pred_fallthru
      _
    // Predicated region
    $region10: #{consistency_forward.1} parent=1 // pred_check
      _
    $region11: #{consistency_forward.1} parent=1 // pred_check_branch
      %34 = sbr.rel (0) target = $region13
    $region12: #{consistency_forward.1} parent=1 // pred_region
      %s36 = ssub.s32 1792, 1792
      %37 = vsyncadd [#allocation6], %s36
      %s38 = sshll.u32 [#allocation7], 4
      %s39 = int_to_ptr.vmem [resolvable:$true] %s38
      %44 = dma.hbm_to_vmem [thread:$0]  %s2, 1792, %s39, [#allocation6], 128, 128, 8
    $region13: #{consistency_forward.1} parent=1 // pred_fallthru
      _
    // Predicated region
    $region14: #{consistency_forward.1} parent=1 // pred_check
      _
    $region15: #{consistency_forward.1} parent=1 // pred_check_branch
      %46 = sbr.rel (0) target = $region17
    $region16: #{consistency_forward.1} parent=1 // pred_region
      %47 = dma.done [#allocation3], 128
    $region17: #{consistency_forward.1} parent=1 // pred_fallthru
      _
    // Predicated region
    $region18: #{consistency_forward.1} parent=1 // pred_check
      _
    $region19: #{consistency_forward.1} parent=1 // pred_check_branch
      %49 = sbr.rel (0) target = $region21
    $region20: #{consistency_forward.1} parent=1 // pred_region
      %50 = dma.done [#allocation6], 1024
    $region21: #{consistency_forward.1} parent=1 // pred_fallthru
      _
    // Predicated region
    $region22: #{consistency_forward.1} parent=1 // pred_check
      _
    $region23: #{consistency_forward.1} parent=1 // pred_check_branch
      %52 = sbr.rel (0) target = $region25
    $region24: #{consistency_forward.1} parent=1 // pred_region
      %53 = dma.done [#allocation6], 1792
    $region25: #{consistency_forward.1} parent=1 // pred_fallthru
      _
    %v54 = vld [vmem:[#allocation7] sm:$0xff]
    %v55 = vld [vmem:[#allocation7 + $0x8] sm:$0xff]
    %v56 = vld [vmem:[#allocation7 + $0x10] sm:$0xff]
    %v57 = vld [vmem:[#allocation7 + $0x18] sm:$0xff]
    %v58 = vld [vmem:[#allocation7 + $0x20] sm:$0xff]
    %v59 = vld [vmem:[#allocation7 + $0x28] sm:$0xff]
    %v60 = vld [vmem:[#allocation7 + $0x30] sm:$0xff]
    %v61 = vld [vmem:[#allocation7 + $0x38] sm:$0xff]
    %v62 = vld [vmem:[#allocation7 + $0x40] sm:$0xff]
    %v63 = vld [vmem:[#allocation7 + $0x48] sm:$0xff]
    %v64 = vld [vmem:[#allocation7 + $0x50] sm:$0xff]
    %v65 = vld [vmem:[#allocation7 + $0x58] sm:$0x1]
    %v66 = vld [vmem:[#allocation7 + $0x60] sm:$0x1]
    %v67 = vld [vmem:[#allocation2] sm:$0xff]
    %vm68 = vcmask 130048
    %v70 = vsel %vm68, %v67, 0
    %72 = vmatprep.subr.mxu0 0.0
    %73 = vmatpush1.msra.mxu0 0.0
    %74 = vmatprep.subr.mxu0 0.0
    %75 = vmatpush1.msra.mxu0 0.0
    %76 = vmatprep.subr.mxu0 0.0
    %77 = vmatpush1.msra.mxu0 0.0
    %78 = vmatprep.subr.mxu0 0.0
    %79 = vmatpush1.msra.mxu0 0.0
    %80 = vmatprep.subr.mxu0 0.0
    %81 = vmatpush1.msra.mxu0 0.0
    %82 = vmatprep.subr.mxu0 0.0
    %83 = vmatpush1.msra.mxu0 0.0
    %84 = vmatprep.subr.mxu0 0.0
    %85 = vmatpush1.msra.mxu0 0.0
    %86 = vmatprep.subr.mxu0 0.0
    %87 = vmatpush1.msra.mxu0 0.0
    %88 = vmatprep.subr.mxu0 0.0
    %89 = vmatpush1.msra.mxu0 0.0
    %90 = vmatprep.subr.mxu0 0.0
    %91 = vmatpush1.msra.mxu0 0.0
    %92 = vmatprep.subr.mxu0 0.0
    %93 = vmatpush1.msra.mxu0 0.0
    %94 = vmatprep.subr.mxu0 0.0
    %95 = vmatpush1.msra.mxu0 0.0
    %96 = vmatprep.subr.mxu0 0.0
    %97 = vmatpush1.msra.mxu0 0.0
    %98 = vmatprep.subr.mxu0 0.0
    %99 = vmatpush1.msra.mxu0 0.0
    %100 = vmatprep.subr.mxu0 0.0
    %101 = vmatpush1.msra.mxu0 %v56
    %102 = vmatprep.subr.mxu0 0.0
    %103 = vmatpush1.msra.mxu0 %v55
    %104 = vmatprep.subr.mxu0 0.0
    %105 = vmatpush2.msra.mxu0 0.0
    %106 = vmatprep.subr.mxu0 0.0
    %107 = vmatpush2.msra.mxu0 0.0
    %108 = vmatprep.subr.mxu0 0.0
    %109 = vmatpush2.msra.mxu0 0.0
    %110 = vmatprep.subr.mxu0 0.0
    %111 = vmatpush2.msra.mxu0 0.0
    %112 = vmatprep.subr.mxu0 0.0
    %113 = vmatpush2.msra.mxu0 0.0
    %114 = vmatprep.subr.mxu0 0.0
    %115 = vmatpush2.msra.mxu0 0.0
    %116 = vmatprep.subr.mxu0 0.0
    %117 = vmatpush2.msra.mxu0 0.0
    %118 = vmatprep.subr.mxu0 0.0
    %119 = vmatpush2.msra.mxu0 0.0
    %120 = vmatprep.subr.mxu0 0.0
    %121 = vmatpush2.msra.mxu0 0.0
    %122 = vmatprep.subr.mxu0 0.0
    %123 = vmatpush2.msra.mxu0 0.0
    %124 = vmatprep.subr.mxu0 0.0
    %125 = vmatpush2.msra.mxu0 0.0
    %126 = vmatprep.subr.mxu0 0.0
    %127 = vmatpush2.msra.mxu0 0.0
    %128 = vmatprep.subr.mxu0 0.0
    %129 = vmatpush2.msra.mxu0 0.0
    %130 = vmatprep.subr.mxu0 0.0
    %131 = vmatpush2.msra.mxu0 0.0
    %132 = vmatprep.subr.mxu0 0.0
    %133 = vmatpush2.msra.mxu0 0.0
    %134 = vmatprep.subr.mxu0 0.0
    %135 = vmatpush2.msra.mxu0 0.0
    %136 = vmatprep.mubr.f32.mxu0 0.0
    %137 = vmatmul.mubr.f32.gmra.mxu0 %v70
    %v138 = vpop.f32.mrf.mxu0
    %v139 = vadd.f32 0.0, %v138
    %v140 = vpop.f32.mrf.mxu0
    %141 = vdwg.mxu0
    %v142 = vld [vmem:[#allocation5] sm:$0xff]
    %v143 = vmul.f32 %v142, 80.0
    %v144 = vld [vmem:[#allocation7 + $0x68] sm:$0x1]
    %vm145 = vcmask 64512
    %v147 = vsel %vm145, %v143, 0
    %149 = vmatprep.subr.mxu0 0.0
    %150 = vmatpush1.msra.mxu0 0.0
    %151 = vmatprep.subr.mxu0 0.0
    %152 = vmatpush1.msra.mxu0 0.0
    %153 = vmatprep.subr.mxu0 0.0
    %154 = vmatpush1.msra.mxu0 0.0
    %155 = vmatprep.subr.mxu0 0.0
    %156 = vmatpush1.msra.mxu0 0.0
    %157 = vmatprep.subr.mxu0 0.0
    %158 = vmatpush1.msra.mxu0 0.0
    %159 = vmatprep.subr.mxu0 0.0
    %160 = vmatpush1.msra.mxu0 0.0
    %161 = vmatprep.subr.mxu0 0.0
    %162 = vmatpush1.msra.mxu0 0.0
    %163 = vmatprep.subr.mxu0 0.0
    %164 = vmatpush1.msra.mxu0 0.0
    %165 = vmatprep.subr.mxu0 0.0
    %166 = vmatpush1.msra.mxu0 0.0
    %167 = vmatprep.subr.mxu0 0.0
    %168 = vmatpush1.msra.mxu0 0.0
    %169 = vmatprep.subr.mxu0 0.0
    %170 = vmatpush1.msra.mxu0 0.0
    %171 = vmatprep.subr.mxu0 0.0
    %172 = vmatpush1.msra.mxu0 0.0
    %173 = vmatprep.subr.mxu0 0.0
    %174 = vmatpush1.msra.mxu0 0.0
    %175 = vmatprep.subr.mxu0 0.0
    %176 = vmatpush1.msra.mxu0 0.0
    %177 = vmatprep.subr.mxu0 0.0
    %178 = vmatpush1.msra.mxu0 0.0
    %179 = vmatprep.subr.mxu0 0.0
    %180 = vmatpush1.msra.mxu0 %v54
    %181 = vmatprep.subr.mxu0 0.0
    %182 = vmatpush2.msra.mxu0 0.0
    %183 = vmatprep.subr.mxu0 0.0
    %184 = vmatpush2.msra.mxu0 0.0
    %185 = vmatprep.subr.mxu0 0.0
    %186 = vmatpush2.msra.mxu0 0.0
    %187 = vmatprep.subr.mxu0 0.0
    %188 = vmatpush2.msra.mxu0 0.0
    %189 = vmatprep.subr.mxu0 0.0
    %190 = vmatpush2.msra.mxu0 0.0
    %191 = vmatprep.subr.mxu0 0.0
    %192 = vmatpush2.msra.mxu0 0.0
    %193 = vmatprep.subr.mxu0 0.0
    %194 = vmatpush2.msra.mxu0 0.0
    %195 = vmatprep.subr.mxu0 0.0
    %196 = vmatpush2.msra.mxu0 0.0
    %197 = vmatprep.subr.mxu0 0.0
    %198 = vmatpush2.msra.mxu0 0.0
    %199 = vmatprep.subr.mxu0 0.0
    %200 = vmatpush2.msra.mxu0 0.0
    %201 = vmatprep.subr.mxu0 0.0
    %202 = vmatpush2.msra.mxu0 0.0
    %203 = vmatprep.subr.mxu0 0.0
    %204 = vmatpush2.msra.mxu0 0.0
    %205 = vmatprep.subr.mxu0 0.0
    %206 = vmatpush2.msra.mxu0 0.0
    %207 = vmatprep.subr.mxu0 0.0
    %208 = vmatpush2.msra.mxu0 0.0
    %209 = vmatprep.subr.mxu0 0.0
    %210 = vmatpush2.msra.mxu0 0.0
    %211 = vmatprep.subr.mxu0 0.0
    %212 = vmatpush2.msra.mxu0 0.0
    %213 = vmatprep.mubr.f32.mxu0 0.0
    %214 = vmatmul.mubr.f32.gmra.mxu0 %v147
    %v215 = vpop.f32.mrf.mxu0
    %v216 = vadd.f32 %v139, %v215
    %v217 = vpop.f32.mrf.mxu0
    %218 = vdwg.mxu0
    %v219 = vlaneseq
    %v220 = vshrl.u32 %v219, 7
    %v221 = vsub.s32 0, %v220
    %v222 = vrot.slane %v144, %v221
    %v223 = vadd.f32 %v216, %v222
    %v224 = vmin.f32 %v223, 20.0
    %v225 = vmul.f32 %v224, 1.442695
    %v226 = vpow.pop %v225
    %v227 = vadd.f32 %v226, 1.0
    %v228 = vmul.f32 %v227, %v227
    %v229 = vsub.f32 %v228, 1.0
    %v230 = vmul.f32 %v223, %v229
    %v231 = vadd.f32 %v228, 1.0
    %v232 = vrcp.pop %v231
    %v233 = vmul.f32 %v230, %v232
    %v234 = vlaneseq
    %v235 = vshrl.u32 %v234, 7
    %v236 = vsub.s32 0, %v235
    %v237 = vrot.slane %v65, %v236
    %vm238 = vcmask 261120
    %v240 = vsel %vm238, %v233, 0
    %242 = vmatprep.subr.mxu0 0.0
    %243 = vmatpush1.msra.mxu0 0.0
    %244 = vmatprep.subr.mxu0 0.0
    %245 = vmatpush1.msra.mxu0 0.0
    %246 = vmatprep.subr.mxu0 0.0
    %247 = vmatpush1.msra.mxu0 0.0
    %248 = vmatprep.subr.mxu0 0.0
    %249 = vmatpush1.msra.mxu0 0.0
    %250 = vmatprep.subr.mxu0 0.0
    %251 = vmatpush1.msra.mxu0 0.0
    %252 = vmatprep.subr.mxu0 0.0
    %253 = vmatpush1.msra.mxu0 0.0
    %254 = vmatprep.subr.mxu0 0.0
    %255 = vmatpush1.msra.mxu0 0.0
    %256 = vmatprep.subr.mxu0 0.0
    %257 = vmatpush1.msra.mxu0 0.0
    %258 = vmatprep.subr.mxu0 0.0
    %259 = vmatpush1.msra.mxu0 0.0
    %260 = vmatprep.subr.mxu0 0.0
    %261 = vmatpush1.msra.mxu0 0.0
    %262 = vmatprep.subr.mxu0 0.0
    %263 = vmatpush1.msra.mxu0 0.0
    %264 = vmatprep.subr.mxu0 0.0
    %265 = vmatpush1.msra.mxu0 0.0
    %266 = vmatprep.subr.mxu0 0.0
    %267 = vmatpush1.msra.mxu0 %v60
    %268 = vmatprep.subr.mxu0 0.0
    %269 = vmatpush1.msra.mxu0 %v59
    %270 = vmatprep.subr.mxu0 0.0
    %271 = vmatpush1.msra.mxu0 %v58
    %272 = vmatprep.subr.mxu0 0.0
    %273 = vmatpush1.msra.mxu0 %v57
    %274 = vmatprep.subr.mxu0 0.0
    %275 = vmatpush2.msra.mxu0 0.0
    %276 = vmatprep.subr.mxu0 0.0
    %277 = vmatpush2.msra.mxu0 0.0
    %278 = vmatprep.subr.mxu0 0.0
    %279 = vmatpush2.msra.mxu0 0.0
    %280 = vmatprep.subr.mxu0 0.0
    %281 = vmatpush2.msra.mxu0 0.0
    %282 = vmatprep.subr.mxu0 0.0
    %283 = vmatpush2.msra.mxu0 0.0
    %284 = vmatprep.subr.mxu0 0.0
    %285 = vmatpush2.msra.mxu0 0.0
    %286 = vmatprep.subr.mxu0 0.0
    %287 = vmatpush2.msra.mxu0 0.0
    %288 = vmatprep.subr.mxu0 0.0
    %289 = vmatpush2.msra.mxu0 0.0
    %290 = vmatprep.subr.mxu0 0.0
    %291 = vmatpush2.msra.mxu0 0.0
    %292 = vmatprep.subr.mxu0 0.0
    %293 = vmatpush2.msra.mxu0 0.0
    %294 = vmatprep.subr.mxu0 0.0
    %295 = vmatpush2.msra.mxu0 0.0
    %296 = vmatprep.subr.mxu0 0.0
    %297 = vmatpush2.msra.mxu0 0.0
    %298 = vmatprep.subr.mxu0 0.0
    %299 = vmatpush2.msra.mxu0 0.0
    %300 = vmatprep.subr.mxu0 0.0
    %301 = vmatpush2.msra.mxu0 0.0
    %302 = vmatprep.subr.mxu0 0.0
    %303 = vmatpush2.msra.mxu0 0.0
    %304 = vmatprep.subr.mxu0 0.0
    %305 = vmatpush2.msra.mxu0 0.0
    %306 = vmatprep.mubr.f32.mxu0 0.0
    %307 = vmatmul.mubr.f32.gmra.mxu0 %v240
    %v308 = vpop.f32.mrf.mxu0
    %v309 = vadd.f32 %v237, %v308
    %v310 = vpop.f32.mrf.mxu0
    %311 = vdwg.mxu0
    %v312 = vmin.f32 %v309, 20.0
    %v313 = vmul.f32 %v312, 1.442695
    %v314 = vpow.pop %v313
    %v315 = vadd.f32 %v314, 1.0
    %v316 = vmul.f32 %v315, %v315
    %v317 = vsub.f32 %v316, 1.0
    %v318 = vmul.f32 %v309, %v317
    %v319 = vadd.f32 %v316, 1.0
    %v320 = vrcp.pop %v319
    %v321 = vmul.f32 %v318, %v320
    %v322 = vlaneseq
    %v323 = vshrl.u32 %v322, 7
    %v324 = vsub.s32 0, %v323
    %v325 = vrot.slane %v66, %v324
    %v327 = vsel %vm238, %v321, 0
    %329 = vmatprep.subr.mxu0 0.0
    %330 = vmatpush1.msra.mxu0 0.0
    %331 = vmatprep.subr.mxu0 0.0
    %332 = vmatpush1.msra.mxu0 0.0
    %333 = vmatprep.subr.mxu0 0.0
    %334 = vmatpush1.msra.mxu0 0.0
    %335 = vmatprep.subr.mxu0 0.0
    %336 = vmatpush1.msra.mxu0 0.0
    %337 = vmatprep.subr.mxu0 0.0
    %338 = vmatpush1.msra.mxu0 0.0
    %339 = vmatprep.subr.mxu0 0.0
    %340 = vmatpush1.msra.mxu0 0.0
    %341 = vmatprep.subr.mxu0 0.0
    %342 = vmatpush1.msra.mxu0 0.0
    %343 = vmatprep.subr.mxu0 0.0
    %344 = vmatpush1.msra.mxu0 0.0
    %345 = vmatprep.subr.mxu0 0.0
    %346 = vmatpush1.msra.mxu0 0.0
    %347 = vmatprep.subr.mxu0 0.0
    %348 = vmatpush1.msra.mxu0 0.0
    %349 = vmatprep.subr.mxu0 0.0
    %350 = vmatpush1.msra.mxu0 0.0
    %351 = vmatprep.subr.mxu0 0.0
    %352 = vmatpush1.msra.mxu0 0.0
    %353 = vmatprep.subr.mxu0 0.0
    %354 = vmatpush1.msra.mxu0 %v64
    %355 = vmatprep.subr.mxu0 0.0
    %356 = vmatpush1.msra.mxu0 %v63
    %357 = vmatprep.subr.mxu0 0.0
    %358 = vmatpush1.msra.mxu0 %v62
    %359 = vmatprep.subr.mxu0 0.0
    %360 = vmatpush1.msra.mxu0 %v61
    %361 = vmatprep.subr.mxu0 0.0
    %362 = vmatpush2.msra.mxu0 0.0
    %363 = vmatprep.subr.mxu0 0.0
    %364 = vmatpush2.msra.mxu0 0.0
    %365 = vmatprep.subr.mxu0 0.0
    %366 = vmatpush2.msra.mxu0 0.0
    %367 = vmatprep.subr.mxu0 0.0
    %368 = vmatpush2.msra.mxu0 0.0
    %369 = vmatprep.subr.mxu0 0.0
    %370 = vmatpush2.msra.mxu0 0.0
    %371 = vmatprep.subr.mxu0 0.0
    %372 = vmatpush2.msra.mxu0 0.0
    %373 = vmatprep.subr.mxu0 0.0
    %374 = vmatpush2.msra.mxu0 0.0
    %375 = vmatprep.subr.mxu0 0.0
    %376 = vmatpush2.msra.mxu0 0.0
    %377 = vmatprep.subr.mxu0 0.0
    %378 = vmatpush2.msra.mxu0 0.0
    %379 = vmatprep.subr.mxu0 0.0
    %380 = vmatpush2.msra.mxu0 0.0
    %381 = vmatprep.subr.mxu0 0.0
    %382 = vmatpush2.msra.mxu0 0.0
    %383 = vmatprep.subr.mxu0 0.0
    %384 = vmatpush2.msra.mxu0 0.0
    %385 = vmatprep.subr.mxu0 0.0
    %386 = vmatpush2.msra.mxu0 0.0
    %387 = vmatprep.subr.mxu0 0.0
    %388 = vmatpush2.msra.mxu0 0.0
    %389 = vmatprep.subr.mxu0 0.0
    %390 = vmatpush2.msra.mxu0 0.0
    %391 = vmatprep.subr.mxu0 0.0
    %392 = vmatpush2.msra.mxu0 0.0
    %393 = vmatprep.mubr.f32.mxu0 0.0
    %394 = vmatmul.mubr.f32.gmra.mxu0 %v327
    %v395 = vpop.f32.mrf.mxu0
    %v396 = vadd.f32 %v325, %v395
    %v397 = vpop.f32.mrf.mxu0
    %398 = vdwg.mxu0
    %v399 = vmul.f32 %v143, 3.906293e-05
    %v400 = vmul.f32 %v396, 0.49997774
    %v401 = vadd.f32 %v399, %v400
    %s402 = scalar_lea.vmem [#allocation5], 8
    %v403 = vld [vmem:[%s402] sm:$0xff]
    %v404 = vmul.f32 %v403, 68.85714
    %v405 = vadd.f32 %v401, %v404
    %v406 = vld [vmem:[#allocation7 + $0x69] sm:$0x1]
    %v408 = vsel %vm145, %v405, 0
    %410 = vmatprep.subr.mxu0 0.0
    %411 = vmatpush1.msra.mxu0 0.0
    %412 = vmatprep.subr.mxu0 0.0
    %413 = vmatpush1.msra.mxu0 0.0
    %414 = vmatprep.subr.mxu0 0.0
    %415 = vmatpush1.msra.mxu0 0.0
    %416 = vmatprep.subr.mxu0 0.0
    %417 = vmatpush1.msra.mxu0 0.0
    %418 = vmatprep.subr.mxu0 0.0
    %419 = vmatpush1.msra.mxu0 0.0
    %420 = vmatprep.subr.mxu0 0.0
    %421 = vmatpush1.msra.mxu0 0.0
    %422 = vmatprep.subr.mxu0 0.0
    %423 = vmatpush1.msra.mxu0 0.0
    %424 = vmatprep.subr.mxu0 0.0
    %425 = vmatpush1.msra.mxu0 0.0
    %426 = vmatprep.subr.mxu0 0.0
    %427 = vmatpush1.msra.mxu0 0.0
    %428 = vmatprep.subr.mxu0 0.0
    %429 = vmatpush1.msra.mxu0 0.0
    %430 = vmatprep.subr.mxu0 0.0
    %431 = vmatpush1.msra.mxu0 0.0
    %432 = vmatprep.subr.mxu0 0.0
    %433 = vmatpush1.msra.mxu0 0.0
    %434 = vmatprep.subr.mxu0 0.0
    %435 = vmatpush1.msra.mxu0 0.0
    %436 = vmatprep.subr.mxu0 0.0
    %437 = vmatpush1.msra.mxu0 0.0
    %438 = vmatprep.subr.mxu0 0.0
    %439 = vmatpush1.msra.mxu0 0.0
    %440 = vmatprep.subr.mxu0 0.0
    %441 = vmatpush1.msra.mxu0 %v54
    %442 = vmatprep.subr.mxu0 0.0
    %443 = vmatpush2.msra.mxu0 0.0
    %444 = vmatprep.subr.mxu0 0.0
    %445 = vmatpush2.msra.mxu0 0.0
    %446 = vmatprep.subr.mxu0 0.0
    %447 = vmatpush2.msra.mxu0 0.0
    %448 = vmatprep.subr.mxu0 0.0
    %449 = vmatpush2.msra.mxu0 0.0
    %450 = vmatprep.subr.mxu0 0.0
    %451 = vmatpush2.msra.mxu0 0.0
    %452 = vmatprep.subr.mxu0 0.0
    %453 = vmatpush2.msra.mxu0 0.0
    %454 = vmatprep.subr.mxu0 0.0
    %455 = vmatpush2.msra.mxu0 0.0
    %456 = vmatprep.subr.mxu0 0.0
    %457 = vmatpush2.msra.mxu0 0.0
    %458 = vmatprep.subr.mxu0 0.0
    %459 = vmatpush2.msra.mxu0 0.0
    %460 = vmatprep.subr.mxu0 0.0
    %461 = vmatpush2.msra.mxu0 0.0
    %462 = vmatprep.subr.mxu0 0.0
    %463 = vmatpush2.msra.mxu0 0.0
    %464 = vmatprep.subr.mxu0 0.0
    %465 = vmatpush2.msra.mxu0 0.0
    %466 = vmatprep.subr.mxu0 0.0
    %467 = vmatpush2.msra.mxu0 0.0
    %468 = vmatprep.subr.mxu0 0.0
    %469 = vmatpush2.msra.mxu0 0.0
    %470 = vmatprep.subr.mxu0 0.0
    %471 = vmatpush2.msra.mxu0 0.0
    %472 = vmatprep.subr.mxu0 0.0
    %473 = vmatpush2.msra.mxu0 0.0
    %474 = vmatprep.mubr.f32.mxu0 0.0
    %475 = vmatmul.mubr.f32.gmra.mxu0 %v408
    %v476 = vpop.f32.mrf.mxu0
    %v477 = vadd.f32 %v139, %v476
    %v478 = vpop.f32.mrf.mxu0
    %479 = vdwg.mxu0
    %v480 = vlaneseq
    %v481 = vshrl.u32 %v480, 7
    %v482 = vsub.s32 0, %v481
    %v483 = vrot.slane %v406, %v482
    %v484 = vadd.f32 %v477, %v483
    %v485 = vmin.f32 %v484, 20.0
    %v486 = vmul.f32 %v485, 1.442695
    %v487 = vpow.pop %v486
    %v488 = vadd.f32 %v487, 1.0
    %v489 = vmul.f32 %v488, %v488
    %v490 = vsub.f32 %v489, 1.0
    %v491 = vmul.f32 %v484, %v490
    %v492 = vadd.f32 %v489, 1.0
    %v493 = vrcp.pop %v492
    %v494 = vmul.f32 %v491, %v493
    %v496 = vsel %vm238, %v494, 0
    %498 = vmatprep.subr.mxu0 0.0
    %499 = vmatpush1.msra.mxu0 0.0
    %500 = vmatprep.subr.mxu0 0.0
    %501 = vmatpush1.msra.mxu0 0.0
    %502 = vmatprep.subr.mxu0 0.0
    %503 = vmatpush1.msra.mxu0 0.0
    %504 = vmatprep.subr.mxu0 0.0
    %505 = vmatpush1.msra.mxu0 0.0
    %506 = vmatprep.subr.mxu0 0.0
    %507 = vmatpush1.msra.mxu0 0.0
    %508 = vmatprep.subr.mxu0 0.0
    %509 = vmatpush1.msra.mxu0 0.0
    %510 = vmatprep.subr.mxu0 0.0
    %511 = vmatpush1.msra.mxu0 0.0
    %512 = vmatprep.subr.mxu0 0.0
    %513 = vmatpush1.msra.mxu0 0.0
    %514 = vmatprep.subr.mxu0 0.0
    %515 = vmatpush1.msra.mxu0 0.0
    %516 = vmatprep.subr.mxu0 0.0
    %517 = vmatpush1.msra.mxu0 0.0
    %518 = vmatprep.subr.mxu0 0.0
    %519 = vmatpush1.msra.mxu0 0.0
    %520 = vmatprep.subr.mxu0 0.0
    %521 = vmatpush1.msra.mxu0 0.0
    %522 = vmatprep.subr.mxu0 0.0
    %523 = vmatpush1.msra.mxu0 %v60
    %524 = vmatprep.subr.mxu0 0.0
    %525 = vmatpush1.msra.mxu0 %v59
    %526 = vmatprep.subr.mxu0 0.0
    %527 = vmatpush1.msra.mxu0 %v58
    %528 = vmatprep.subr.mxu0 0.0
    %529 = vmatpush1.msra.mxu0 %v57
    %530 = vmatprep.subr.mxu0 0.0
    %531 = vmatpush2.msra.mxu0 0.0
    %532 = vmatprep.subr.mxu0 0.0
    %533 = vmatpush2.msra.mxu0 0.0
    %534 = vmatprep.subr.mxu0 0.0
    %535 = vmatpush2.msra.mxu0 0.0
    %536 = vmatprep.subr.mxu0 0.0
    %537 = vmatpush2.msra.mxu0 0.0
    %538 = vmatprep.subr.mxu0 0.0
    %539 = vmatpush2.msra.mxu0 0.0
    %540 = vmatprep.subr.mxu0 0.0
    %541 = vmatpush2.msra.mxu0 0.0
    %542 = vmatprep.subr.mxu0 0.0
    %543 = vmatpush2.msra.mxu0 0.0
    %544 = vmatprep.subr.mxu0 0.0
    %545 = vmatpush2.msra.mxu0 0.0
    %546 = vmatprep.subr.mxu0 0.0
    %547 = vmatpush2.msra.mxu0 0.0
    %548 = vmatprep.subr.mxu0 0.0
    %549 = vmatpush2.msra.mxu0 0.0
    %550 = vmatprep.subr.mxu0 0.0
    %551 = vmatpush2.msra.mxu0 0.0
    %552 = vmatprep.subr.mxu0 0.0
    %553 = vmatpush2.msra.mxu0 0.0
    %554 = vmatprep.subr.mxu0 0.0
    %555 = vmatpush2.msra.mxu0 0.0
    %556 = vmatprep.subr.mxu0 0.0
    %557 = vmatpush2.msra.mxu0 0.0
    %558 = vmatprep.subr.mxu0 0.0
    %559 = vmatpush2.msra.mxu0 0.0
    %560 = vmatprep.subr.mxu0 0.0
    %561 = vmatpush2.msra.mxu0 0.0
    %562 = vmatprep.mubr.f32.mxu0 0.0
    %563 = vmatmul.mubr.f32.gmra.mxu0 %v496
    %v564 = vpop.f32.mrf.mxu0
    %v565 = vadd.f32 %v237, %v564
    %v566 = vpop.f32.mrf.mxu0
    %567 = vdwg.mxu0
    %v568 = vmin.f32 %v565, 20.0
    %v569 = vmul.f32 %v568, 1.442695
    %v570 = vpow.pop %v569
    %v571 = vadd.f32 %v570, 1.0
    %v572 = vmul.f32 %v571, %v571
    %v573 = vsub.f32 %v572, 1.0
    %v574 = vmul.f32 %v565, %v573
    %v575 = vadd.f32 %v572, 1.0
    %v576 = vrcp.pop %v575
    %v577 = vmul.f32 %v574, %v576
    %v579 = vsel %vm238, %v577, 0
    %581 = vmatprep.subr.mxu0 0.0
    %582 = vmatpush1.msra.mxu0 0.0
    %583 = vmatprep.subr.mxu0 0.0
    %584 = vmatpush1.msra.mxu0 0.0
    %585 = vmatprep.subr.mxu0 0.0
    %586 = vmatpush1.msra.mxu0 0.0
    %587 = vmatprep.subr.mxu0 0.0
    %588 = vmatpush1.msra.mxu0 0.0
    %589 = vmatprep.subr.mxu0 0.0
    %590 = vmatpush1.msra.mxu0 0.0
    %591 = vmatprep.subr.mxu0 0.0
    %592 = vmatpush1.msra.mxu0 0.0
    %593 = vmatprep.subr.mxu0 0.0
    %594 = vmatpush1.msra.mxu0 0.0
    %595 = vmatprep.subr.mxu0 0.0
    %596 = vmatpush1.msra.mxu0 0.0
    %597 = vmatprep.subr.mxu0 0.0
    %598 = vmatpush1.msra.mxu0 0.0
    %599 = vmatprep.subr.mxu0 0.0
    %600 = vmatpush1.msra.mxu0 0.0
    %601 = vmatprep.subr.mxu0 0.0
    %602 = vmatpush1.msra.mxu0 0.0
    %603 = vmatprep.subr.mxu0 0.0
    %604 = vmatpush1.msra.mxu0 0.0
    %605 = vmatprep.subr.mxu0 0.0
    %606 = vmatpush1.msra.mxu0 %v64
    %607 = vmatprep.subr.mxu0 0.0
    %608 = vmatpush1.msra.mxu0 %v63
    %609 = vmatprep.subr.mxu0 0.0
    %610 = vmatpush1.msra.mxu0 %v62
    %611 = vmatprep.subr.mxu0 0.0
    %612 = vmatpush1.msra.mxu0 %v61
    %613 = vmatprep.subr.mxu0 0.0
    %614 = vmatpush2.msra.mxu0 0.0
    %615 = vmatprep.subr.mxu0 0.0
    %616 = vmatpush2.msra.mxu0 0.0
    %617 = vmatprep.subr.mxu0 0.0
    %618 = vmatpush2.msra.mxu0 0.0
    %619 = vmatprep.subr.mxu0 0.0
    %620 = vmatpush2.msra.mxu0 0.0
    %621 = vmatprep.subr.mxu0 0.0
    %622 = vmatpush2.msra.mxu0 0.0
    %623 = vmatprep.subr.mxu0 0.0
    %624 = vmatpush2.msra.mxu0 0.0
    %625 = vmatprep.subr.mxu0 0.0
    %626 = vmatpush2.msra.mxu0 0.0
    %627 = vmatprep.subr.mxu0 0.0
    %628 = vmatpush2.msra.mxu0 0.0
    %629 = vmatprep.subr.mxu0 0.0
    %630 = vmatpush2.msra.mxu0 0.0
    %631 = vmatprep.subr.mxu0 0.0
    %632 = vmatpush2.msra.mxu0 0.0
    %633 = vmatprep.subr.mxu0 0.0
    %634 = vmatpush2.msra.mxu0 0.0
    %635 = vmatprep.subr.mxu0 0.0
    %636 = vmatpush2.msra.mxu0 0.0
    %637 = vmatprep.subr.mxu0 0.0
    %638 = vmatpush2.msra.mxu0 0.0
    %639 = vmatprep.subr.mxu0 0.0
    %640 = vmatpush2.msra.mxu0 0.0
    %641 = vmatprep.subr.mxu0 0.0
    %642 = vmatpush2.msra.mxu0 0.0
    %643 = vmatprep.subr.mxu0 0.0
    %644 = vmatpush2.msra.mxu0 0.0
    %645 = vmatprep.mubr.f32.mxu0 0.0
    %646 = vmatmul.mubr.f32.gmra.mxu0 %v579
    %v647 = vpop.f32.mrf.mxu0
    %v648 = vadd.f32 %v325, %v647
    %v649 = vpop.f32.mrf.mxu0
    %650 = vdwg.mxu0
    %v651 = vmul.f32 %v405, 5.272837e-05
    %v652 = vmul.f32 %v648, 0.49997228
    %v653 = vadd.f32 %v651, %v652
    %s654 = scalar_lea.vmem [#allocation5], 16
    %v655 = vld [vmem:[%s654] sm:$0xff]
    %v656 = vmul.f32 %v655, 57.714287
    %v657 = vadd.f32 %v653, %v656
    %v658 = vld [vmem:[#allocation7 + $0x6a] sm:$0x1]
    %v660 = vsel %vm145, %v657, 0
    %662 = vmatprep.subr.mxu0 0.0
    %663 = vmatpush1.msra.mxu0 0.0
    %664 = vmatprep.subr.mxu0 0.0
    %665 = vmatpush1.msra.mxu0 0.0
    %666 = vmatprep.subr.mxu0 0.0
    %667 = vmatpush1.msra.mxu0 0.0
    %668 = vmatprep.subr.mxu0 0.0
    %669 = vmatpush1.msra.mxu0 0.0
    %670 = vmatprep.subr.mxu0 0.0
    %671 = vmatpush1.msra.mxu0 0.0
    %672 = vmatprep.subr.mxu0 0.0
    %673 = vmatpush1.msra.mxu0 0.0
    %674 = vmatprep.subr.mxu0 0.0
    %675 = vmatpush1.msra.mxu0 0.0
    %676 = vmatprep.subr.mxu0 0.0
    %677 = vmatpush1.msra.mxu0 0.0
    %678 = vmatprep.subr.mxu0 0.0
    %679 = vmatpush1.msra.mxu0 0.0
    %680 = vmatprep.subr.mxu0 0.0
    %681 = vmatpush1.msra.mxu0 0.0
    %682 = vmatprep.subr.mxu0 0.0
    %683 = vmatpush1.msra.mxu0 0.0
    %684 = vmatprep.subr.mxu0 0.0
    %685 = vmatpush1.msra.mxu0 0.0
    %686 = vmatprep.subr.mxu0 0.0
    %687 = vmatpush1.msra.mxu0 0.0
    %688 = vmatprep.subr.mxu0 0.0
    %689 = vmatpush1.msra.mxu0 0.0
    %690 = vmatprep.subr.mxu0 0.0
    %691 = vmatpush1.msra.mxu0 0.0
    %692 = vmatprep.subr.mxu0 0.0
    %693 = vmatpush1.msra.mxu0 %v54
    %694 = vmatprep.subr.mxu0 0.0
    %695 = vmatpush2.msra.mxu0 0.0
    %696 = vmatprep.subr.mxu0 0.0
    %697 = vmatpush2.msra.mxu0 0.0
    %698 = vmatprep.subr.mxu0 0.0
    %699 = vmatpush2.msra.mxu0 0.0
    %700 = vmatprep.subr.mxu0 0.0
    %701 = vmatpush2.msra.mxu0 0.0
    %702 = vmatprep.subr.mxu0 0.0
    %703 = vmatpush2.msra.mxu0 0.0
    %704 = vmatprep.subr.mxu0 0.0
    %705 = vmatpush2.msra.mxu0 0.0
    %706 = vmatprep.subr.mxu0 0.0
    %707 = vmatpush2.msra.mxu0 0.0
    %708 = vmatprep.subr.mxu0 0.0
    %709 = vmatpush2.msra.mxu0 0.0
    %710 = vmatprep.subr.mxu0 0.0
    %711 = vmatpush2.msra.mxu0 0.0
    %712 = vmatprep.subr.mxu0 0.0
    %713 = vmatpush2.msra.mxu0 0.0
    %714 = vmatprep.subr.mxu0 0.0
    %715 = vmatpush2.msra.mxu0 0.0
    %716 = vmatprep.subr.mxu0 0.0
    %717 = vmatpush2.msra.mxu0 0.0
    %718 = vmatprep.subr.mxu0 0.0
    %719 = vmatpush2.msra.mxu0 0.0
    %720 = vmatprep.subr.mxu0 0.0
    %721 = vmatpush2.msra.mxu0 0.0
    %722 = vmatprep.subr.mxu0 0.0
    %723 = vmatpush2.msra.mxu0 0.0
    %724 = vmatprep.subr.mxu0 0.0
    %725 = vmatpush2.msra.mxu0 0.0
    %726 = vmatprep.mubr.f32.mxu0 0.0
    %727 = vmatmul.mubr.f32.gmra.mxu0 %v660
    %v728 = vpop.f32.mrf.mxu0
    %v729 = vadd.f32 %v139, %v728
    %v730 = vpop.f32.mrf.mxu0
    %731 = vdwg.mxu0
    %v732 = vlaneseq
    %v733 = vshrl.u32 %v732, 7
    %v734 = vsub.s32 0, %v733
    %v735 = vrot.slane %v658, %v734
    %v736 = vadd.f32 %v729, %v735
    %v737 = vmin.f32 %v736, 20.0
    %v738 = vmul.f32 %v737, 1.442695
    %v739 = vpow.pop %v738
    %v740 = vadd.f32 %v739, 1.0
    %v741 = vmul.f32 %v740, %v740
    %v742 = vsub.f32 %v741, 1.0
    %v743 = vmul.f32 %v736, %v742
    %v744 = vadd.f32 %v741, 1.0
    %v745 = vrcp.pop %v744
    %v746 = vmul.f32 %v743, %v745
    %v748 = vsel %vm238, %v746, 0
    %750 = vmatprep.subr.mxu0 0.0
    %751 = vmatpush1.msra.mxu0 0.0
    %752 = vmatprep.subr.mxu0 0.0
    %753 = vmatpush1.msra.mxu0 0.0
    %754 = vmatprep.subr.mxu0 0.0
    %755 = vmatpush1.msra.mxu0 0.0
    %756 = vmatprep.subr.mxu0 0.0
    %757 = vmatpush1.msra.mxu0 0.0
    %758 = vmatprep.subr.mxu0 0.0
    %759 = vmatpush1.msra.mxu0 0.0
    %760 = vmatprep.subr.mxu0 0.0
    %761 = vmatpush1.msra.mxu0 0.0
    %762 = vmatprep.subr.mxu0 0.0
    %763 = vmatpush1.msra.mxu0 0.0
    %764 = vmatprep.subr.mxu0 0.0
    %765 = vmatpush1.msra.mxu0 0.0
    %766 = vmatprep.subr.mxu0 0.0
    %767 = vmatpush1.msra.mxu0 0.0
    %768 = vmatprep.subr.mxu0 0.0
    %769 = vmatpush1.msra.mxu0 0.0
    %770 = vmatprep.subr.mxu0 0.0
    %771 = vmatpush1.msra.mxu0 0.0
    %772 = vmatprep.subr.mxu0 0.0
    %773 = vmatpush1.msra.mxu0 0.0
    %774 = vmatprep.subr.mxu0 0.0
    %775 = vmatpush1.msra.mxu0 %v60
    %776 = vmatprep.subr.mxu0 0.0
    %777 = vmatpush1.msra.mxu0 %v59
    %778 = vmatprep.subr.mxu0 0.0
    %779 = vmatpush1.msra.mxu0 %v58
    %780 = vmatprep.subr.mxu0 0.0
    %781 = vmatpush1.msra.mxu0 %v57
    %782 = vmatprep.subr.mxu0 0.0
    %783 = vmatpush2.msra.mxu0 0.0
    %784 = vmatprep.subr.mxu0 0.0
    %785 = vmatpush2.msra.mxu0 0.0
    %786 = vmatprep.subr.mxu0 0.0
    %787 = vmatpush2.msra.mxu0 0.0
    %788 = vmatprep.subr.mxu0 0.0
    %789 = vmatpush2.msra.mxu0 0.0
    %790 = vmatprep.subr.mxu0 0.0
    %791 = vmatpush2.msra.mxu0 0.0
    %792 = vmatprep.subr.mxu0 0.0
    %793 = vmatpush2.msra.mxu0 0.0
    %794 = vmatprep.subr.mxu0 0.0
    %795 = vmatpush2.msra.mxu0 0.0
    %796 = vmatprep.subr.mxu0 0.0
    %797 = vmatpush2.msra.mxu0 0.0
    %798 = vmatprep.subr.mxu0 0.0
    %799 = vmatpush2.msra.mxu0 0.0
    %800 = vmatprep.subr.mxu0 0.0
    %801 = vmatpush2.msra.mxu0 0.0
    %802 = vmatprep.subr.mxu0 0.0
    %803 = vmatpush2.msra.mxu0 0.0
    %804 = vmatprep.subr.mxu0 0.0
    %805 = vmatpush2.msra.mxu0 0.0
    %806 = vmatprep.subr.mxu0 0.0
    %807 = vmatpush2.msra.mxu0 0.0
    %808 = vmatprep.subr.mxu0 0.0
    %809 = vmatpush2.msra.mxu0 0.0
    %810 = vmatprep.subr.mxu0 0.0
    %811 = vmatpush2.msra.mxu0 0.0
    %812 = vmatprep.subr.mxu0 0.0
    %813 = vmatpush2.msra.mxu0 0.0
    %814 = vmatprep.mubr.f32.mxu0 0.0
    %815 = vmatmul.mubr.f32.gmra.mxu0 %v748
    %v816 = vpop.f32.mrf.mxu0
    %v817 = vadd.f32 %v237, %v816
    %v818 = vpop.f32.mrf.mxu0
    %819 = vdwg.mxu0
    %v820 = vmin.f32 %v817, 20.0
    %v821 = vmul.f32 %v820, 1.442695
    %v822 = vpow.pop %v821
    %v823 = vadd.f32 %v822, 1.0
    %v824 = vmul.f32 %v823, %v823
    %v825 = vsub.f32 %v824, 1.0
    %v826 = vmul.f32 %v817, %v825
    %v827 = vadd.f32 %v824, 1.0
    %v828 = vrcp.pop %v827
    %v829 = vmul.f32 %v826, %v828
    %v831 = vsel %vm238, %v829, 0
    %833 = vmatprep.subr.mxu0 0.0
    %834 = vmatpush1.msra.mxu0 0.0
    %835 = vmatprep.subr.mxu0 0.0
    %836 = vmatpush1.msra.mxu0 0.0
    %837 = vmatprep.subr.mxu0 0.0
    %838 = vmatpush1.msra.mxu0 0.0
    %839 = vmatprep.subr.mxu0 0.0
    %840 = vmatpush1.msra.mxu0 0.0
    %841 = vmatprep.subr.mxu0 0.0
    %842 = vmatpush1.msra.mxu0 0.0
    %843 = vmatprep.subr.mxu0 0.0
    %844 = vmatpush1.msra.mxu0 0.0
    %845 = vmatprep.subr.mxu0 0.0
    %846 = vmatpush1.msra.mxu0 0.0
    %847 = vmatprep.subr.mxu0 0.0
    %848 = vmatpush1.msra.mxu0 0.0
    %849 = vmatprep.subr.mxu0 0.0
    %850 = vmatpush1.msra.mxu0 0.0
    %851 = vmatprep.subr.mxu0 0.0
    %852 = vmatpush1.msra.mxu0 0.0
    %853 = vmatprep.subr.mxu0 0.0
    %854 = vmatpush1.msra.mxu0 0.0
    %855 = vmatprep.subr.mxu0 0.0
    %856 = vmatpush1.msra.mxu0 0.0
    %857 = vmatprep.subr.mxu0 0.0
    %858 = vmatpush1.msra.mxu0 %v64
    %859 = vmatprep.subr.mxu0 0.0
    %860 = vmatpush1.msra.mxu0 %v63
    %861 = vmatprep.subr.mxu0 0.0
    %862 = vmatpush1.msra.mxu0 %v62
    %863 = vmatprep.subr.mxu0 0.0
    %864 = vmatpush1.msra.mxu0 %v61
    %865 = vmatprep.subr.mxu0 0.0
    %866 = vmatpush2.msra.mxu0 0.0
    %867 = vmatprep.subr.mxu0 0.0
    %868 = vmatpush2.msra.mxu0 0.0
    %869 = vmatprep.subr.mxu0 0.0
    %870 = vmatpush2.msra.mxu0 0.0
    %871 = vmatprep.subr.mxu0 0.0
    %872 = vmatpush2.msra.mxu0 0.0
    %873 = vmatprep.subr.mxu0 0.0
    %874 = vmatpush2.msra.mxu0 0.0
    %875 = vmatprep.subr.mxu0 0.0
    %876 = vmatpush2.msra.mxu0 0.0
    %877 = vmatprep.subr.mxu0 0.0
    %878 = vmatpush2.msra.mxu0 0.0
    %879 = vmatprep.subr.mxu0 0.0
    %880 = vmatpush2.msra.mxu0 0.0
    %881 = vmatprep.subr.mxu0 0.0
    %882 = vmatpush2.msra.mxu0 0.0
    %883 = vmatprep.subr.mxu0 0.0
    %884 = vmatpush2.msra.mxu0 0.0
    %885 = vmatprep.subr.mxu0 0.0
    %886 = vmatpush2.msra.mxu0 0.0
    %887 = vmatprep.subr.mxu0 0.0
    %888 = vmatpush2.msra.mxu0 0.0
    %889 = vmatprep.subr.mxu0 0.0
    %890 = vmatpush2.msra.mxu0 0.0
    %891 = vmatprep.subr.mxu0 0.0
    %892 = vmatpush2.msra.mxu0 0.0
    %893 = vmatprep.subr.mxu0 0.0
    %894 = vmatpush2.msra.mxu0 0.0
    %895 = vmatprep.subr.mxu0 0.0
    %896 = vmatpush2.msra.mxu0 0.0
    %897 = vmatprep.mubr.f32.mxu0 0.0
    %898 = vmatmul.mubr.f32.gmra.mxu0 %v831
    %v899 = vpop.f32.mrf.mxu0
    %v900 = vadd.f32 %v325, %v899
    %v901 = vpop.f32.mrf.mxu0
    %902 = vdwg.mxu0
    %v903 = vmul.f32 %v657, 7.505348e-05
    %v904 = vmul.f32 %v900, 0.4999639
    %v905 = vadd.f32 %v903, %v904
    %s906 = scalar_lea.vmem [#allocation5], 24
    %v907 = vld [vmem:[%s906] sm:$0xff]
    %v908 = vmul.f32 %v907, 46.57143
    %v909 = vadd.f32 %v905, %v908
    %v910 = vld [vmem:[#allocation7 + $0x6b] sm:$0x1]
    %v912 = vsel %vm145, %v909, 0
    %914 = vmatprep.subr.mxu0 0.0
    %915 = vmatpush1.msra.mxu0 0.0
    %916 = vmatprep.subr.mxu0 0.0
    %917 = vmatpush1.msra.mxu0 0.0
    %918 = vmatprep.subr.mxu0 0.0
    %919 = vmatpush1.msra.mxu0 0.0
    %920 = vmatprep.subr.mxu0 0.0
    %921 = vmatpush1.msra.mxu0 0.0
    %922 = vmatprep.subr.mxu0 0.0
    %923 = vmatpush1.msra.mxu0 0.0
    %924 = vmatprep.subr.mxu0 0.0
    %925 = vmatpush1.msra.mxu0 0.0
    %926 = vmatprep.subr.mxu0 0.0
    %927 = vmatpush1.msra.mxu0 0.0
    %928 = vmatprep.subr.mxu0 0.0
    %929 = vmatpush1.msra.mxu0 0.0
    %930 = vmatprep.subr.mxu0 0.0
    %931 = vmatpush1.msra.mxu0 0.0
    %932 = vmatprep.subr.mxu0 0.0
    %933 = vmatpush1.msra.mxu0 0.0
    %934 = vmatprep.subr.mxu0 0.0
    %935 = vmatpush1.msra.mxu0 0.0
    %936 = vmatprep.subr.mxu0 0.0
    %937 = vmatpush1.msra.mxu0 0.0
    %938 = vmatprep.subr.mxu0 0.0
    %939 = vmatpush1.msra.mxu0 0.0
    %940 = vmatprep.subr.mxu0 0.0
    %941 = vmatpush1.msra.mxu0 0.0
    %942 = vmatprep.subr.mxu0 0.0
    %943 = vmatpush1.msra.mxu0 0.0
    %944 = vmatprep.subr.mxu0 0.0
    %945 = vmatpush1.msra.mxu0 %v54
    %946 = vmatprep.subr.mxu0 0.0
    %947 = vmatpush2.msra.mxu0 0.0
    %948 = vmatprep.subr.mxu0 0.0
    %949 = vmatpush2.msra.mxu0 0.0
    %950 = vmatprep.subr.mxu0 0.0
    %951 = vmatpush2.msra.mxu0 0.0
    %952 = vmatprep.subr.mxu0 0.0
    %953 = vmatpush2.msra.mxu0 0.0
    %954 = vmatprep.subr.mxu0 0.0
    %955 = vmatpush2.msra.mxu0 0.0
    %956 = vmatprep.subr.mxu0 0.0
    %957 = vmatpush2.msra.mxu0 0.0
    %958 = vmatprep.subr.mxu0 0.0
    %959 = vmatpush2.msra.mxu0 0.0
    %960 = vmatprep.subr.mxu0 0.0
    %961 = vmatpush2.msra.mxu0 0.0
    %962 = vmatprep.subr.mxu0 0.0
    %963 = vmatpush2.msra.mxu0 0.0
    %964 = vmatprep.subr.mxu0 0.0
    %965 = vmatpush2.msra.mxu0 0.0
    %966 = vmatprep.subr.mxu0 0.0
    %967 = vmatpush2.msra.mxu0 0.0
    %968 = vmatprep.subr.mxu0 0.0
    %969 = vmatpush2.msra.mxu0 0.0
    %970 = vmatprep.subr.mxu0 0.0
    %971 = vmatpush2.msra.mxu0 0.0
    %972 = vmatprep.subr.mxu0 0.0
    %973 = vmatpush2.msra.mxu0 0.0
    %974 = vmatprep.subr.mxu0 0.0
    %975 = vmatpush2.msra.mxu0 0.0
    %976 = vmatprep.subr.mxu0 0.0
    %977 = vmatpush2.msra.mxu0 0.0
    %978 = vmatprep.mubr.f32.mxu0 0.0
    %979 = vmatmul.mubr.f32.gmra.mxu0 %v912
    %v980 = vpop.f32.mrf.mxu0
    %v981 = vadd.f32 %v139, %v980
    %v982 = vpop.f32.mrf.mxu0
    %983 = vdwg.mxu0
    %v984 = vlaneseq
    %v985 = vshrl.u32 %v984, 7
    %v986 = vsub.s32 0, %v985
    %v987 = vrot.slane %v910, %v986
    %v988 = vadd.f32 %v981, %v987
    %v989 = vmin.f32 %v988, 20.0
    %v990 = vmul.f32 %v989, 1.442695
    %v991 = vpow.pop %v990
    %v992 = vadd.f32 %v991, 1.0
    %v993 = vmul.f32 %v992, %v992
    %v994 = vsub.f32 %v993, 1.0
    %v995 = vmul.f32 %v988, %v994
    %v996 = vadd.f32 %v993, 1.0
    %v997 = vrcp.pop %v996
    %v998 = vmul.f32 %v995, %v997
    %v1000 = vsel %vm238, %v998, 0
    %1002 = vmatprep.subr.mxu0 0.0
    %1003 = vmatpush1.msra.mxu0 0.0
    %1004 = vmatprep.subr.mxu0 0.0
    %1005 = vmatpush1.msra.mxu0 0.0
    %1006 = vmatprep.subr.mxu0 0.0
    %1007 = vmatpush1.msra.mxu0 0.0
    %1008 = vmatprep.subr.mxu0 0.0
    %1009 = vmatpush1.msra.mxu0 0.0
    %1010 = vmatprep.subr.mxu0 0.0
    %1011 = vmatpush1.msra.mxu0 0.0
    %1012 = vmatprep.subr.mxu0 0.0
    %1013 = vmatpush1.msra.mxu0 0.0
    %1014 = vmatprep.subr.mxu0 0.0
    %1015 = vmatpush1.msra.mxu0 0.0
    %1016 = vmatprep.subr.mxu0 0.0
    %1017 = vmatpush1.msra.mxu0 0.0
    %1018 = vmatprep.subr.mxu0 0.0
    %1019 = vmatpush1.msra.mxu0 0.0
    %1020 = vmatprep.subr.mxu0 0.0
    %1021 = vmatpush1.msra.mxu0 0.0
    %1022 = vmatprep.subr.mxu0 0.0
    %1023 = vmatpush1.msra.mxu0 0.0
    %1024 = vmatprep.subr.mxu0 0.0
    %1025 = vmatpush1.msra.mxu0 0.0
    %1026 = vmatprep.subr.mxu0 0.0
    %1027 = vmatpush1.msra.mxu0 %v60
    %1028 = vmatprep.subr.mxu0 0.0
    %1029 = vmatpush1.msra.mxu0 %v59
    %1030 = vmatprep.subr.mxu0 0.0
    %1031 = vmatpush1.msra.mxu0 %v58
    %1032 = vmatprep.subr.mxu0 0.0
    %1033 = vmatpush1.msra.mxu0 %v57
    %1034 = vmatprep.subr.mxu0 0.0
    %1035 = vmatpush2.msra.mxu0 0.0
    %1036 = vmatprep.subr.mxu0 0.0
    %1037 = vmatpush2.msra.mxu0 0.0
    %1038 = vmatprep.subr.mxu0 0.0
    %1039 = vmatpush2.msra.mxu0 0.0
    %1040 = vmatprep.subr.mxu0 0.0
    %1041 = vmatpush2.msra.mxu0 0.0
    %1042 = vmatprep.subr.mxu0 0.0
    %1043 = vmatpush2.msra.mxu0 0.0
    %1044 = vmatprep.subr.mxu0 0.0
    %1045 = vmatpush2.msra.mxu0 0.0
    %1046 = vmatprep.subr.mxu0 0.0
    %1047 = vmatpush2.msra.mxu0 0.0
    %1048 = vmatprep.subr.mxu0 0.0
    %1049 = vmatpush2.msra.mxu0 0.0
    %1050 = vmatprep.subr.mxu0 0.0
    %1051 = vmatpush2.msra.mxu0 0.0
    %1052 = vmatprep.subr.mxu0 0.0
    %1053 = vmatpush2.msra.mxu0 0.0
    %1054 = vmatprep.subr.mxu0 0.0
    %1055 = vmatpush2.msra.mxu0 0.0
    %1056 = vmatprep.subr.mxu0 0.0
    %1057 = vmatpush2.msra.mxu0 0.0
    %1058 = vmatprep.subr.mxu0 0.0
    %1059 = vmatpush2.msra.mxu0 0.0
    %1060 = vmatprep.subr.mxu0 0.0
    %1061 = vmatpush2.msra.mxu0 0.0
    %1062 = vmatprep.subr.mxu0 0.0
    %1063 = vmatpush2.msra.mxu0 0.0
    %1064 = vmatprep.subr.mxu0 0.0
    %1065 = vmatpush2.msra.mxu0 0.0
    %1066 = vmatprep.mubr.f32.mxu0 0.0
    %1067 = vmatmul.mubr.f32.gmra.mxu0 %v1000
    %v1068 = vpop.f32.mrf.mxu0
    %v1069 = vadd.f32 %v237, %v1068
    %v1070 = vpop.f32.mrf.mxu0
    %1071 = vdwg.mxu0
    %v1072 = vmin.f32 %v1069, 20.0
    %v1073 = vmul.f32 %v1072, 1.442695
    %v1074 = vpow.pop %v1073
    %v1075 = vadd.f32 %v1074, 1.0
    %v1076 = vmul.f32 %v1075, %v1075
    %v1077 = vsub.f32 %v1076, 1.0
    %v1078 = vmul.f32 %v1069, %v1077
    %v1079 = vadd.f32 %v1076, 1.0
    %v1080 = vrcp.pop %v1079
    %v1081 = vmul.f32 %v1078, %v1080
    %v1083 = vsel %vm238, %v1081, 0
    %1085 = vmatprep.subr.mxu0 0.0
    %1086 = vmatpush1.msra.mxu0 0.0
    %1087 = vmatprep.subr.mxu0 0.0
    %1088 = vmatpush1.msra.mxu0 0.0
    %1089 = vmatprep.subr.mxu0 0.0
    %1090 = vmatpush1.msra.mxu0 0.0
    %1091 = vmatprep.subr.mxu0 0.0
    %1092 = vmatpush1.msra.mxu0 0.0
    %1093 = vmatprep.subr.mxu0 0.0
    %1094 = vmatpush1.msra.mxu0 0.0
    %1095 = vmatprep.subr.mxu0 0.0
    %1096 = vmatpush1.msra.mxu0 0.0
    %1097 = vmatprep.subr.mxu0 0.0
    %1098 = vmatpush1.msra.mxu0 0.0
    %1099 = vmatprep.subr.mxu0 0.0
    %1100 = vmatpush1.msra.mxu0 0.0
    %1101 = vmatprep.subr.mxu0 0.0
    %1102 = vmatpush1.msra.mxu0 0.0
    %1103 = vmatprep.subr.mxu0 0.0
    %1104 = vmatpush1.msra.mxu0 0.0
    %1105 = vmatprep.subr.mxu0 0.0
    %1106 = vmatpush1.msra.mxu0 0.0
    %1107 = vmatprep.subr.mxu0 0.0
    %1108 = vmatpush1.msra.mxu0 0.0
    %1109 = vmatprep.subr.mxu0 0.0
    %1110 = vmatpush1.msra.mxu0 %v64
    %1111 = vmatprep.subr.mxu0 0.0
    %1112 = vmatpush1.msra.mxu0 %v63
    %1113 = vmatprep.subr.mxu0 0.0
    %1114 = vmatpush1.msra.mxu0 %v62
    %1115 = vmatprep.subr.mxu0 0.0
    %1116 = vmatpush1.msra.mxu0 %v61
    %1117 = vmatprep.subr.mxu0 0.0
    %1118 = vmatpush2.msra.mxu0 0.0
    %1119 = vmatprep.subr.mxu0 0.0
    %1120 = vmatpush2.msra.mxu0 0.0
    %1121 = vmatprep.subr.mxu0 0.0
    %1122 = vmatpush2.msra.mxu0 0.0
    %1123 = vmatprep.subr.mxu0 0.0
    %1124 = vmatpush2.msra.mxu0 0.0
    %1125 = vmatprep.subr.mxu0 0.0
    %1126 = vmatpush2.msra.mxu0 0.0
    %1127 = vmatprep.subr.mxu0 0.0
    %1128 = vmatpush2.msra.mxu0 0.0
    %1129 = vmatprep.subr.mxu0 0.0
    %1130 = vmatpush2.msra.mxu0 0.0
    %1131 = vmatprep.subr.mxu0 0.0
    %1132 = vmatpush2.msra.mxu0 0.0
    %1133 = vmatprep.subr.mxu0 0.0
    %1134 = vmatpush2.msra.mxu0 0.0
    %1135 = vmatprep.subr.mxu0 0.0
    %1136 = vmatpush2.msra.mxu0 0.0
    %1137 = vmatprep.subr.mxu0 0.0
    %1138 = vmatpush2.msra.mxu0 0.0
    %1139 = vmatprep.subr.mxu0 0.0
    %1140 = vmatpush2.msra.mxu0 0.0
    %1141 = vmatprep.subr.mxu0 0.0
    %1142 = vmatpush2.msra.mxu0 0.0
    %1143 = vmatprep.subr.mxu0 0.0
    %1144 = vmatpush2.msra.mxu0 0.0
    %1145 = vmatprep.subr.mxu0 0.0
    %1146 = vmatpush2.msra.mxu0 0.0
    %1147 = vmatprep.subr.mxu0 0.0
    %1148 = vmatpush2.msra.mxu0 0.0
    %1149 = vmatprep.mubr.f32.mxu0 0.0
    %1150 = vmatmul.mubr.f32.gmra.mxu0 %v1083
    %v1151 = vpop.f32.mrf.mxu0
    %v1152 = vadd.f32 %v325, %v1151
    %v1153 = vpop.f32.mrf.mxu0
    %1154 = vdwg.mxu0
    %v1155 = vmul.f32 %v909, 0.00011526253
    %v1156 = vmul.f32 %v1152, 0.49994972
    %v1157 = vadd.f32 %v1155, %v1156
    %s1158 = scalar_lea.vmem [#allocation5], 32
    %v1159 = vld [vmem:[%s1158] sm:$0xff]
    %v1160 = vmul.f32 %v1159, 35.42857
    %v1161 = vadd.f32 %v1157, %v1160
    %v1162 = vld [vmem:[#allocation7 + $0x6c] sm:$0x1]
    %v1164 = vsel %vm145, %v1161, 0
    %1166 = vmatprep.subr.mxu0 0.0
    %1167 = vmatpush1.msra.mxu0 0.0
    %1168 = vmatprep.subr.mxu0 0.0
    %1169 = vmatpush1.msra.mxu0 0.0
    %1170 = vmatprep.subr.mxu0 0.0
    %1171 = vmatpush1.msra.mxu0 0.0
    %1172 = vmatprep.subr.mxu0 0.0
    %1173 = vmatpush1.msra.mxu0 0.0
    %1174 = vmatprep.subr.mxu0 0.0
    %1175 = vmatpush1.msra.mxu0 0.0
    %1176 = vmatprep.subr.mxu0 0.0
    %1177 = vmatpush1.msra.mxu0 0.0
    %1178 = vmatprep.subr.mxu0 0.0
    %1179 = vmatpush1.msra.mxu0 0.0
    %1180 = vmatprep.subr.mxu0 0.0
    %1181 = vmatpush1.msra.mxu0 0.0
    %1182 = vmatprep.subr.mxu0 0.0
    %1183 = vmatpush1.msra.mxu0 0.0
    %1184 = vmatprep.subr.mxu0 0.0
    %1185 = vmatpush1.msra.mxu0 0.0
    %1186 = vmatprep.subr.mxu0 0.0
    %1187 = vmatpush1.msra.mxu0 0.0
    %1188 = vmatprep.subr.mxu0 0.0
    %1189 = vmatpush1.msra.mxu0 0.0
    %1190 = vmatprep.subr.mxu0 0.0
    %1191 = vmatpush1.msra.mxu0 0.0
    %1192 = vmatprep.subr.mxu0 0.0
    %1193 = vmatpush1.msra.mxu0 0.0
    %1194 = vmatprep.subr.mxu0 0.0
    %1195 = vmatpush1.msra.mxu0 0.0
    %1196 = vmatprep.subr.mxu0 0.0
    %1197 = vmatpush1.msra.mxu0 %v54
    %1198 = vmatprep.subr.mxu0 0.0
    %1199 = vmatpush2.msra.mxu0 0.0
    %1200 = vmatprep.subr.mxu0 0.0
    %1201 = vmatpush2.msra.mxu0 0.0
    %1202 = vmatprep.subr.mxu0 0.0
    %1203 = vmatpush2.msra.mxu0 0.0
    %1204 = vmatprep.subr.mxu0 0.0
    %1205 = vmatpush2.msra.mxu0 0.0
    %1206 = vmatprep.subr.mxu0 0.0
    %1207 = vmatpush2.msra.mxu0 0.0
    %1208 = vmatprep.subr.mxu0 0.0
    %1209 = vmatpush2.msra.mxu0 0.0
    %1210 = vmatprep.subr.mxu0 0.0
    %1211 = vmatpush2.msra.mxu0 0.0
    %1212 = vmatprep.subr.mxu0 0.0
    %1213 = vmatpush2.msra.mxu0 0.0
    %1214 = vmatprep.subr.mxu0 0.0
    %1215 = vmatpush2.msra.mxu0 0.0
    %1216 = vmatprep.subr.mxu0 0.0
    %1217 = vmatpush2.msra.mxu0 0.0
    %1218 = vmatprep.subr.mxu0 0.0
    %1219 = vmatpush2.msra.mxu0 0.0
    %1220 = vmatprep.subr.mxu0 0.0
    %1221 = vmatpush2.msra.mxu0 0.0
    %1222 = vmatprep.subr.mxu0 0.0
    %1223 = vmatpush2.msra.mxu0 0.0
    %1224 = vmatprep.subr.mxu0 0.0
    %1225 = vmatpush2.msra.mxu0 0.0
    %1226 = vmatprep.subr.mxu0 0.0
    %1227 = vmatpush2.msra.mxu0 0.0
    %1228 = vmatprep.subr.mxu0 0.0
    %1229 = vmatpush2.msra.mxu0 0.0
    %1230 = vmatprep.mubr.f32.mxu0 0.0
    %1231 = vmatmul.mubr.f32.gmra.mxu0 %v1164
    %v1232 = vpop.f32.mrf.mxu0
    %v1233 = vadd.f32 %v139, %v1232
    %v1234 = vpop.f32.mrf.mxu0
    %1235 = vdwg.mxu0
    %v1236 = vlaneseq
    %v1237 = vshrl.u32 %v1236, 7
    %v1238 = vsub.s32 0, %v1237
    %v1239 = vrot.slane %v1162, %v1238
    %v1240 = vadd.f32 %v1233, %v1239
    %v1241 = vmin.f32 %v1240, 20.0
    %v1242 = vmul.f32 %v1241, 1.442695
    %v1243 = vpow.pop %v1242
    %v1244 = vadd.f32 %v1243, 1.0
    %v1245 = vmul.f32 %v1244, %v1244
    %v1246 = vsub.f32 %v1245, 1.0
    %v1247 = vmul.f32 %v1240, %v1246
    %v1248 = vadd.f32 %v1245, 1.0
    %v1249 = vrcp.pop %v1248
    %v1250 = vmul.f32 %v1247, %v1249
    %v1252 = vsel %vm238, %v1250, 0
    %1254 = vmatprep.subr.mxu0 0.0
    %1255 = vmatpush1.msra.mxu0 0.0
    %1256 = vmatprep.subr.mxu0 0.0
    %1257 = vmatpush1.msra.mxu0 0.0
    %1258 = vmatprep.subr.mxu0 0.0
    %1259 = vmatpush1.msra.mxu0 0.0
    %1260 = vmatprep.subr.mxu0 0.0
    %1261 = vmatpush1.msra.mxu0 0.0
    %1262 = vmatprep.subr.mxu0 0.0
    %1263 = vmatpush1.msra.mxu0 0.0
    %1264 = vmatprep.subr.mxu0 0.0
    %1265 = vmatpush1.msra.mxu0 0.0
    %1266 = vmatprep.subr.mxu0 0.0
    %1267 = vmatpush1.msra.mxu0 0.0
    %1268 = vmatprep.subr.mxu0 0.0
    %1269 = vmatpush1.msra.mxu0 0.0
    %1270 = vmatprep.subr.mxu0 0.0
    %1271 = vmatpush1.msra.mxu0 0.0
    %1272 = vmatprep.subr.mxu0 0.0
    %1273 = vmatpush1.msra.mxu0 0.0
    %1274 = vmatprep.subr.mxu0 0.0
    %1275 = vmatpush1.msra.mxu0 0.0
    %1276 = vmatprep.subr.mxu0 0.0
    %1277 = vmatpush1.msra.mxu0 0.0
    %1278 = vmatprep.subr.mxu0 0.0
    %1279 = vmatpush1.msra.mxu0 %v60
    %1280 = vmatprep.subr.mxu0 0.0
    %1281 = vmatpush1.msra.mxu0 %v59
    %1282 = vmatprep.subr.mxu0 0.0
    %1283 = vmatpush1.msra.mxu0 %v58
    %1284 = vmatprep.subr.mxu0 0.0
    %1285 = vmatpush1.msra.mxu0 %v57
    %1286 = vmatprep.subr.mxu0 0.0
    %1287 = vmatpush2.msra.mxu0 0.0
    %1288 = vmatprep.subr.mxu0 0.0
    %1289 = vmatpush2.msra.mxu0 0.0
    %1290 = vmatprep.subr.mxu0 0.0
    %1291 = vmatpush2.msra.mxu0 0.0
    %1292 = vmatprep.subr.mxu0 0.0
    %1293 = vmatpush2.msra.mxu0 0.0
    %1294 = vmatprep.subr.mxu0 0.0
    %1295 = vmatpush2.msra.mxu0 0.0
    %1296 = vmatprep.subr.mxu0 0.0
    %1297 = vmatpush2.msra.mxu0 0.0
    %1298 = vmatprep.subr.mxu0 0.0
    %1299 = vmatpush2.msra.mxu0 0.0
    %1300 = vmatprep.subr.mxu0 0.0
    %1301 = vmatpush2.msra.mxu0 0.0
    %1302 = vmatprep.subr.mxu0 0.0
    %1303 = vmatpush2.msra.mxu0 0.0
    %1304 = vmatprep.subr.mxu0 0.0
    %1305 = vmatpush2.msra.mxu0 0.0
    %1306 = vmatprep.subr.mxu0 0.0
    %1307 = vmatpush2.msra.mxu0 0.0
    %1308 = vmatprep.subr.mxu0 0.0
    %1309 = vmatpush2.msra.mxu0 0.0
    %1310 = vmatprep.subr.mxu0 0.0
    %1311 = vmatpush2.msra.mxu0 0.0
    %1312 = vmatprep.subr.mxu0 0.0
    %1313 = vmatpush2.msra.mxu0 0.0
    %1314 = vmatprep.subr.mxu0 0.0
    %1315 = vmatpush2.msra.mxu0 0.0
    %1316 = vmatprep.subr.mxu0 0.0
    %1317 = vmatpush2.msra.mxu0 0.0
    %1318 = vmatprep.mubr.f32.mxu0 0.0
    %1319 = vmatmul.mubr.f32.gmra.mxu0 %v1252
    %v1320 = vpop.f32.mrf.mxu0
    %v1321 = vadd.f32 %v237, %v1320
    %v1322 = vpop.f32.mrf.mxu0
    %1323 = vdwg.mxu0
    %v1324 = vmin.f32 %v1321, 20.0
    %v1325 = vmul.f32 %v1324, 1.442695
    %v1326 = vpow.pop %v1325
    %v1327 = vadd.f32 %v1326, 1.0
    %v1328 = vmul.f32 %v1327, %v1327
    %v1329 = vsub.f32 %v1328, 1.0
    %v1330 = vmul.f32 %v1321, %v1329
    %v1331 = vadd.f32 %v1328, 1.0
    %v1332 = vrcp.pop %v1331
    %v1333 = vmul.f32 %v1330, %v1332
    %v1335 = vsel %vm238, %v1333, 0
    %1337 = vmatprep.subr.mxu0 0.0
    %1338 = vmatpush1.msra.mxu0 0.0
    %1339 = vmatprep.subr.mxu0 0.0
    %1340 = vmatpush1.msra.mxu0 0.0
    %1341 = vmatprep.subr.mxu0 0.0
    %1342 = vmatpush1.msra.mxu0 0.0
    %1343 = vmatprep.subr.mxu0 0.0
    %1344 = vmatpush1.msra.mxu0 0.0
    %1345 = vmatprep.subr.mxu0 0.0
    %1346 = vmatpush1.msra.mxu0 0.0
    %1347 = vmatprep.subr.mxu0 0.0
    %1348 = vmatpush1.msra.mxu0 0.0
    %1349 = vmatprep.subr.mxu0 0.0
    %1350 = vmatpush1.msra.mxu0 0.0
    %1351 = vmatprep.subr.mxu0 0.0
    %1352 = vmatpush1.msra.mxu0 0.0
    %1353 = vmatprep.subr.mxu0 0.0
    %1354 = vmatpush1.msra.mxu0 0.0
    %1355 = vmatprep.subr.mxu0 0.0
    %1356 = vmatpush1.msra.mxu0 0.0
    %1357 = vmatprep.subr.mxu0 0.0
    %1358 = vmatpush1.msra.mxu0 0.0
    %1359 = vmatprep.subr.mxu0 0.0
    %1360 = vmatpush1.msra.mxu0 0.0
    %1361 = vmatprep.subr.mxu0 0.0
    %1362 = vmatpush1.msra.mxu0 %v64
    %1363 = vmatprep.subr.mxu0 0.0
    %1364 = vmatpush1.msra.mxu0 %v63
    %1365 = vmatprep.subr.mxu0 0.0
    %1366 = vmatpush1.msra.mxu0 %v62
    %1367 = vmatprep.subr.mxu0 0.0
    %1368 = vmatpush1.msra.mxu0 %v61
    %1369 = vmatprep.subr.mxu0 0.0
    %1370 = vmatpush2.msra.mxu0 0.0
    %1371 = vmatprep.subr.mxu0 0.0
    %1372 = vmatpush2.msra.mxu0 0.0
    %1373 = vmatprep.subr.mxu0 0.0
    %1374 = vmatpush2.msra.mxu0 0.0
    %1375 = vmatprep.subr.mxu0 0.0
    %1376 = vmatpush2.msra.mxu0 0.0
    %1377 = vmatprep.subr.mxu0 0.0
    %1378 = vmatpush2.msra.mxu0 0.0
    %1379 = vmatprep.subr.mxu0 0.0
    %1380 = vmatpush2.msra.mxu0 0.0
    %1381 = vmatprep.subr.mxu0 0.0
    %1382 = vmatpush2.msra.mxu0 0.0
    %1383 = vmatprep.subr.mxu0 0.0
    %1384 = vmatpush2.msra.mxu0 0.0
    %1385 = vmatprep.subr.mxu0 0.0
    %1386 = vmatpush2.msra.mxu0 0.0
    %1387 = vmatprep.subr.mxu0 0.0
    %1388 = vmatpush2.msra.mxu0 0.0
    %1389 = vmatprep.subr.mxu0 0.0
    %1390 = vmatpush2.msra.mxu0 0.0
    %1391 = vmatprep.subr.mxu0 0.0
    %1392 = vmatpush2.msra.mxu0 0.0
    %1393 = vmatprep.subr.mxu0 0.0
    %1394 = vmatpush2.msra.mxu0 0.0
    %1395 = vmatprep.subr.mxu0 0.0
    %1396 = vmatpush2.msra.mxu0 0.0
    %1397 = vmatprep.subr.mxu0 0.0
    %1398 = vmatpush2.msra.mxu0 0.0
    %1399 = vmatprep.subr.mxu0 0.0
    %1400 = vmatpush2.msra.mxu0 0.0
    %1401 = vmatprep.mubr.f32.mxu0 0.0
    %1402 = vmatmul.mubr.f32.gmra.mxu0 %v1335
    %v1403 = vpop.f32.mrf.mxu0
    %v1404 = vadd.f32 %v325, %v1403
    %v1405 = vpop.f32.mrf.mxu0
    %1406 = vdwg.mxu0
    %v1407 = vmul.f32 %v1161, 0.00019915686
    %v1408 = vmul.f32 %v1404, 0.49992198
    %v1409 = vadd.f32 %v1407, %v1408
    %s1410 = scalar_lea.vmem [#allocation5], 40
    %v1411 = vld [vmem:[%s1410] sm:$0xff]
    %v1412 = vmul.f32 %v1411, 24.285715
    %v1413 = vadd.f32 %v1409, %v1412
    %v1414 = vld [vmem:[#allocation7 + $0x6d] sm:$0x1]
    %v1416 = vsel %vm145, %v1413, 0
    %1418 = vmatprep.subr.mxu0 0.0
    %1419 = vmatpush1.msra.mxu0 0.0
    %1420 = vmatprep.subr.mxu0 0.0
    %1421 = vmatpush1.msra.mxu0 0.0
    %1422 = vmatprep.subr.mxu0 0.0
    %1423 = vmatpush1.msra.mxu0 0.0
    %1424 = vmatprep.subr.mxu0 0.0
    %1425 = vmatpush1.msra.mxu0 0.0
    %1426 = vmatprep.subr.mxu0 0.0
    %1427 = vmatpush1.msra.mxu0 0.0
    %1428 = vmatprep.subr.mxu0 0.0
    %1429 = vmatpush1.msra.mxu0 0.0
    %1430 = vmatprep.subr.mxu0 0.0
    %1431 = vmatpush1.msra.mxu0 0.0
    %1432 = vmatprep.subr.mxu0 0.0
    %1433 = vmatpush1.msra.mxu0 0.0
    %1434 = vmatprep.subr.mxu0 0.0
    %1435 = vmatpush1.msra.mxu0 0.0
    %1436 = vmatprep.subr.mxu0 0.0
    %1437 = vmatpush1.msra.mxu0 0.0
    %1438 = vmatprep.subr.mxu0 0.0
    %1439 = vmatpush1.msra.mxu0 0.0
    %1440 = vmatprep.subr.mxu0 0.0
    %1441 = vmatpush1.msra.mxu0 0.0
    %1442 = vmatprep.subr.mxu0 0.0
    %1443 = vmatpush1.msra.mxu0 0.0
    %1444 = vmatprep.subr.mxu0 0.0
    %1445 = vmatpush1.msra.mxu0 0.0
    %1446 = vmatprep.subr.mxu0 0.0
    %1447 = vmatpush1.msra.mxu0 0.0
    %1448 = vmatprep.subr.mxu0 0.0
    %1449 = vmatpush1.msra.mxu0 %v54
    %1450 = vmatprep.subr.mxu0 0.0
    %1451 = vmatpush2.msra.mxu0 0.0
    %1452 = vmatprep.subr.mxu0 0.0
    %1453 = vmatpush2.msra.mxu0 0.0
    %1454 = vmatprep.subr.mxu0 0.0
    %1455 = vmatpush2.msra.mxu0 0.0
    %1456 = vmatprep.subr.mxu0 0.0
    %1457 = vmatpush2.msra.mxu0 0.0
    %1458 = vmatprep.subr.mxu0 0.0
    %1459 = vmatpush2.msra.mxu0 0.0
    %1460 = vmatprep.subr.mxu0 0.0
    %1461 = vmatpush2.msra.mxu0 0.0
    %1462 = vmatprep.subr.mxu0 0.0
    %1463 = vmatpush2.msra.mxu0 0.0
    %1464 = vmatprep.subr.mxu0 0.0
    %1465 = vmatpush2.msra.mxu0 0.0
    %1466 = vmatprep.subr.mxu0 0.0
    %1467 = vmatpush2.msra.mxu0 0.0
    %1468 = vmatprep.subr.mxu0 0.0
    %1469 = vmatpush2.msra.mxu0 0.0
    %1470 = vmatprep.subr.mxu0 0.0
    %1471 = vmatpush2.msra.mxu0 0.0
    %1472 = vmatprep.subr.mxu0 0.0
    %1473 = vmatpush2.msra.mxu0 0.0
    %1474 = vmatprep.subr.mxu0 0.0
    %1475 = vmatpush2.msra.mxu0 0.0
    %1476 = vmatprep.subr.mxu0 0.0
    %1477 = vmatpush2.msra.mxu0 0.0
    %1478 = vmatprep.subr.mxu0 0.0
    %1479 = vmatpush2.msra.mxu0 0.0
    %1480 = vmatprep.subr.mxu0 0.0
    %1481 = vmatpush2.msra.mxu0 0.0
    %1482 = vmatprep.mubr.f32.mxu0 0.0
    %1483 = vmatmul.mubr.f32.gmra.mxu0 %v1416
    %v1484 = vpop.f32.mrf.mxu0
    %v1485 = vadd.f32 %v139, %v1484
    %v1486 = vpop.f32.mrf.mxu0
    %1487 = vdwg.mxu0
    %v1488 = vlaneseq
    %v1489 = vshrl.u32 %v1488, 7
    %v1490 = vsub.s32 0, %v1489
    %v1491 = vrot.slane %v1414, %v1490
    %v1492 = vadd.f32 %v1485, %v1491
    %v1493 = vmin.f32 %v1492, 20.0
    %v1494 = vmul.f32 %v1493, 1.442695
    %v1495 = vpow.pop %v1494
    %v1496 = vadd.f32 %v1495, 1.0
    %v1497 = vmul.f32 %v1496, %v1496
    %v1498 = vsub.f32 %v1497, 1.0
    %v1499 = vmul.f32 %v1492, %v1498
    %v1500 = vadd.f32 %v1497, 1.0
    %v1501 = vrcp.pop %v1500
    %v1502 = vmul.f32 %v1499, %v1501
    %v1504 = vsel %vm238, %v1502, 0
    %1506 = vmatprep.subr.mxu0 0.0
    %1507 = vmatpush1.msra.mxu0 0.0
    %1508 = vmatprep.subr.mxu0 0.0
    %1509 = vmatpush1.msra.mxu0 0.0
    %1510 = vmatprep.subr.mxu0 0.0
    %1511 = vmatpush1.msra.mxu0 0.0
    %1512 = vmatprep.subr.mxu0 0.0
    %1513 = vmatpush1.msra.mxu0 0.0
    %1514 = vmatprep.subr.mxu0 0.0
    %1515 = vmatpush1.msra.mxu0 0.0
    %1516 = vmatprep.subr.mxu0 0.0
    %1517 = vmatpush1.msra.mxu0 0.0
    %1518 = vmatprep.subr.mxu0 0.0
    %1519 = vmatpush1.msra.mxu0 0.0
    %1520 = vmatprep.subr.mxu0 0.0
    %1521 = vmatpush1.msra.mxu0 0.0
    %1522 = vmatprep.subr.mxu0 0.0
    %1523 = vmatpush1.msra.mxu0 0.0
    %1524 = vmatprep.subr.mxu0 0.0
    %1525 = vmatpush1.msra.mxu0 0.0
    %1526 = vmatprep.subr.mxu0 0.0
    %1527 = vmatpush1.msra.mxu0 0.0
    %1528 = vmatprep.subr.mxu0 0.0
    %1529 = vmatpush1.msra.mxu0 0.0
    %1530 = vmatprep.subr.mxu0 0.0
    %1531 = vmatpush1.msra.mxu0 %v60
    %1532 = vmatprep.subr.mxu0 0.0
    %1533 = vmatpush1.msra.mxu0 %v59
    %1534 = vmatprep.subr.mxu0 0.0
    %1535 = vmatpush1.msra.mxu0 %v58
    %1536 = vmatprep.subr.mxu0 0.0
    %1537 = vmatpush1.msra.mxu0 %v57
    %1538 = vmatprep.subr.mxu0 0.0
    %1539 = vmatpush2.msra.mxu0 0.0
    %1540 = vmatprep.subr.mxu0 0.0
    %1541 = vmatpush2.msra.mxu0 0.0
    %1542 = vmatprep.subr.mxu0 0.0
    %1543 = vmatpush2.msra.mxu0 0.0
    %1544 = vmatprep.subr.mxu0 0.0
    %1545 = vmatpush2.msra.mxu0 0.0
    %1546 = vmatprep.subr.mxu0 0.0
    %1547 = vmatpush2.msra.mxu0 0.0
    %1548 = vmatprep.subr.mxu0 0.0
    %1549 = vmatpush2.msra.mxu0 0.0
    %1550 = vmatprep.subr.mxu0 0.0
    %1551 = vmatpush2.msra.mxu0 0.0
    %1552 = vmatprep.subr.mxu0 0.0
    %1553 = vmatpush2.msra.mxu0 0.0
    %1554 = vmatprep.subr.mxu0 0.0
    %1555 = vmatpush2.msra.mxu0 0.0
    %1556 = vmatprep.subr.mxu0 0.0
    %1557 = vmatpush2.msra.mxu0 0.0
    %1558 = vmatprep.subr.mxu0 0.0
    %1559 = vmatpush2.msra.mxu0 0.0
    %1560 = vmatprep.subr.mxu0 0.0
    %1561 = vmatpush2.msra.mxu0 0.0
    %1562 = vmatprep.subr.mxu0 0.0
    %1563 = vmatpush2.msra.mxu0 0.0
    %1564 = vmatprep.subr.mxu0 0.0
    %1565 = vmatpush2.msra.mxu0 0.0
    %1566 = vmatprep.subr.mxu0 0.0
    %1567 = vmatpush2.msra.mxu0 0.0
    %1568 = vmatprep.subr.mxu0 0.0
    %1569 = vmatpush2.msra.mxu0 0.0
    %1570 = vmatprep.mubr.f32.mxu0 0.0
    %1571 = vmatmul.mubr.f32.gmra.mxu0 %v1504
    %v1572 = vpop.f32.mrf.mxu0
    %v1573 = vadd.f32 %v237, %v1572
    %v1574 = vpop.f32.mrf.mxu0
    %1575 = vdwg.mxu0
    %v1576 = vmin.f32 %v1573, 20.0
    %v1577 = vmul.f32 %v1576, 1.442695
    %v1578 = vpow.pop %v1577
    %v1579 = vadd.f32 %v1578, 1.0
    %v1580 = vmul.f32 %v1579, %v1579
    %v1581 = vsub.f32 %v1580, 1.0
    %v1582 = vmul.f32 %v1573, %v1581
    %v1583 = vadd.f32 %v1580, 1.0
    %v1584 = vrcp.pop %v1583
    %v1585 = vmul.f32 %v1582, %v1584
    %v1587 = vsel %vm238, %v1585, 0
    %1589 = vmatprep.subr.mxu0 0.0
    %1590 = vmatpush1.msra.mxu0 0.0
    %1591 = vmatprep.subr.mxu0 0.0
    %1592 = vmatpush1.msra.mxu0 0.0
    %1593 = vmatprep.subr.mxu0 0.0
    %1594 = vmatpush1.msra.mxu0 0.0
    %1595 = vmatprep.subr.mxu0 0.0
    %1596 = vmatpush1.msra.mxu0 0.0
    %1597 = vmatprep.subr.mxu0 0.0
    %1598 = vmatpush1.msra.mxu0 0.0
    %1599 = vmatprep.subr.mxu0 0.0
    %1600 = vmatpush1.msra.mxu0 0.0
    %1601 = vmatprep.subr.mxu0 0.0
    %1602 = vmatpush1.msra.mxu0 0.0
    %1603 = vmatprep.subr.mxu0 0.0
    %1604 = vmatpush1.msra.mxu0 0.0
    %1605 = vmatprep.subr.mxu0 0.0
    %1606 = vmatpush1.msra.mxu0 0.0
    %1607 = vmatprep.subr.mxu0 0.0
    %1608 = vmatpush1.msra.mxu0 0.0
    %1609 = vmatprep.subr.mxu0 0.0
    %1610 = vmatpush1.msra.mxu0 0.0
    %1611 = vmatprep.subr.mxu0 0.0
    %1612 = vmatpush1.msra.mxu0 0.0
    %1613 = vmatprep.subr.mxu0 0.0
    %1614 = vmatpush1.msra.mxu0 %v64
    %1615 = vmatprep.subr.mxu0 0.0
    %1616 = vmatpush1.msra.mxu0 %v63
    %1617 = vmatprep.subr.mxu0 0.0
    %1618 = vmatpush1.msra.mxu0 %v62
    %1619 = vmatprep.subr.mxu0 0.0
    %1620 = vmatpush1.msra.mxu0 %v61
    %1621 = vmatprep.subr.mxu0 0.0
    %1622 = vmatpush2.msra.mxu0 0.0
    %1623 = vmatprep.subr.mxu0 0.0
    %1624 = vmatpush2.msra.mxu0 0.0
    %1625 = vmatprep.subr.mxu0 0.0
    %1626 = vmatpush2.msra.mxu0 0.0
    %1627 = vmatprep.subr.mxu0 0.0
    %1628 = vmatpush2.msra.mxu0 0.0
    %1629 = vmatprep.subr.mxu0 0.0
    %1630 = vmatpush2.msra.mxu0 0.0
    %1631 = vmatprep.subr.mxu0 0.0
    %1632 = vmatpush2.msra.mxu0 0.0
    %1633 = vmatprep.subr.mxu0 0.0
    %1634 = vmatpush2.msra.mxu0 0.0
    %1635 = vmatprep.subr.mxu0 0.0
    %1636 = vmatpush2.msra.mxu0 0.0
    %1637 = vmatprep.subr.mxu0 0.0
    %1638 = vmatpush2.msra.mxu0 0.0
    %1639 = vmatprep.subr.mxu0 0.0
    %1640 = vmatpush2.msra.mxu0 0.0
    %1641 = vmatprep.subr.mxu0 0.0
    %1642 = vmatpush2.msra.mxu0 0.0
    %1643 = vmatprep.subr.mxu0 0.0
    %1644 = vmatpush2.msra.mxu0 0.0
    %1645 = vmatprep.subr.mxu0 0.0
    %1646 = vmatpush2.msra.mxu0 0.0
    %1647 = vmatprep.subr.mxu0 0.0
    %1648 = vmatpush2.msra.mxu0 0.0
    %1649 = vmatprep.subr.mxu0 0.0
    %1650 = vmatpush2.msra.mxu0 0.0
    %1651 = vmatprep.subr.mxu0 0.0
    %1652 = vmatpush2.msra.mxu0 0.0
    %1653 = vmatprep.mubr.f32.mxu0 0.0
    %1654 = vmatmul.mubr.f32.gmra.mxu0 %v1587
    %v1655 = vpop.f32.mrf.mxu0
    %v1656 = vadd.f32 %v325, %v1655
    %v1657 = vpop.f32.mrf.mxu0
    %1658 = vdwg.mxu0
    %v1659 = vmul.f32 %v1413, 0.0004237656
    %v1660 = vmul.f32 %v1656, 0.4998529
    %v1661 = vadd.f32 %v1659, %v1660
    %s1662 = scalar_lea.vmem [#allocation5], 48
    %v1663 = vld [vmem:[%s1662] sm:$0xff]
    %v1664 = vmul.f32 %v1663, 13.142857
    %v1665 = vadd.f32 %v1661, %v1664
    %v1666 = vld [vmem:[#allocation7 + $0x6e] sm:$0x1]
    %v1668 = vsel %vm145, %v1665, 0
    %1670 = vmatprep.subr.mxu0 0.0
    %1671 = vmatpush1.msra.mxu0 0.0
    %1672 = vmatprep.subr.mxu0 0.0
    %1673 = vmatpush1.msra.mxu0 0.0
    %1674 = vmatprep.subr.mxu0 0.0
    %1675 = vmatpush1.msra.mxu0 0.0
    %1676 = vmatprep.subr.mxu0 0.0
    %1677 = vmatpush1.msra.mxu0 0.0
    %1678 = vmatprep.subr.mxu0 0.0
    %1679 = vmatpush1.msra.mxu0 0.0
    %1680 = vmatprep.subr.mxu0 0.0
    %1681 = vmatpush1.msra.mxu0 0.0
    %1682 = vmatprep.subr.mxu0 0.0
    %1683 = vmatpush1.msra.mxu0 0.0
    %1684 = vmatprep.subr.mxu0 0.0
    %1685 = vmatpush1.msra.mxu0 0.0
    %1686 = vmatprep.subr.mxu0 0.0
    %1687 = vmatpush1.msra.mxu0 0.0
    %1688 = vmatprep.subr.mxu0 0.0
    %1689 = vmatpush1.msra.mxu0 0.0
    %1690 = vmatprep.subr.mxu0 0.0
    %1691 = vmatpush1.msra.mxu0 0.0
    %1692 = vmatprep.subr.mxu0 0.0
    %1693 = vmatpush1.msra.mxu0 0.0
    %1694 = vmatprep.subr.mxu0 0.0
    %1695 = vmatpush1.msra.mxu0 0.0
    %1696 = vmatprep.subr.mxu0 0.0
    %1697 = vmatpush1.msra.mxu0 0.0
    %1698 = vmatprep.subr.mxu0 0.0
    %1699 = vmatpush1.msra.mxu0 0.0
    %1700 = vmatprep.subr.mxu0 0.0
    %1701 = vmatpush1.msra.mxu0 %v54
    %1702 = vmatprep.subr.mxu0 0.0
    %1703 = vmatpush2.msra.mxu0 0.0
    %1704 = vmatprep.subr.mxu0 0.0
    %1705 = vmatpush2.msra.mxu0 0.0
    %1706 = vmatprep.subr.mxu0 0.0
    %1707 = vmatpush2.msra.mxu0 0.0
    %1708 = vmatprep.subr.mxu0 0.0
    %1709 = vmatpush2.msra.mxu0 0.0
    %1710 = vmatprep.subr.mxu0 0.0
    %1711 = vmatpush2.msra.mxu0 0.0
    %1712 = vmatprep.subr.mxu0 0.0
    %1713 = vmatpush2.msra.mxu0 0.0
    %1714 = vmatprep.subr.mxu0 0.0
    %1715 = vmatpush2.msra.mxu0 0.0
    %1716 = vmatprep.subr.mxu0 0.0
    %1717 = vmatpush2.msra.mxu0 0.0
    %1718 = vmatprep.subr.mxu0 0.0
    %1719 = vmatpush2.msra.mxu0 0.0
    %1720 = vmatprep.subr.mxu0 0.0
    %1721 = vmatpush2.msra.mxu0 0.0
    %1722 = vmatprep.subr.mxu0 0.0
    %1723 = vmatpush2.msra.mxu0 0.0
    %1724 = vmatprep.subr.mxu0 0.0
    %1725 = vmatpush2.msra.mxu0 0.0
    %1726 = vmatprep.subr.mxu0 0.0
    %1727 = vmatpush2.msra.mxu0 0.0
    %1728 = vmatprep.subr.mxu0 0.0
    %1729 = vmatpush2.msra.mxu0 0.0
    %1730 = vmatprep.subr.mxu0 0.0
    %1731 = vmatpush2.msra.mxu0 0.0
    %1732 = vmatprep.subr.mxu0 0.0
    %1733 = vmatpush2.msra.mxu0 0.0
    %1734 = vmatprep.mubr.f32.mxu0 0.0
    %1735 = vmatmul.mubr.f32.gmra.mxu0 %v1668
    %v1736 = vpop.f32.mrf.mxu0
    %v1737 = vadd.f32 %v139, %v1736
    %v1738 = vpop.f32.mrf.mxu0
    %1739 = vdwg.mxu0
    %v1740 = vlaneseq
    %v1741 = vshrl.u32 %v1740, 7
    %v1742 = vsub.s32 0, %v1741
    %v1743 = vrot.slane %v1666, %v1742
    %v1744 = vadd.f32 %v1737, %v1743
    %v1745 = vmin.f32 %v1744, 20.0
    %v1746 = vmul.f32 %v1745, 1.442695
    %v1747 = vpow.pop %v1746
    %v1748 = vadd.f32 %v1747, 1.0
    %v1749 = vmul.f32 %v1748, %v1748
    %v1750 = vsub.f32 %v1749, 1.0
    %v1751 = vmul.f32 %v1744, %v1750
    %v1752 = vadd.f32 %v1749, 1.0
    %v1753 = vrcp.pop %v1752
    %v1754 = vmul.f32 %v1751, %v1753
    %v1756 = vsel %vm238, %v1754, 0
    %1758 = vmatprep.subr.mxu0 0.0
    %1759 = vmatpush1.msra.mxu0 0.0
    %1760 = vmatprep.subr.mxu0 0.0
    %1761 = vmatpush1.msra.mxu0 0.0
    %1762 = vmatprep.subr.mxu0 0.0
    %1763 = vmatpush1.msra.mxu0 0.0
    %1764 = vmatprep.subr.mxu0 0.0
    %1765 = vmatpush1.msra.mxu0 0.0
    %1766 = vmatprep.subr.mxu0 0.0
    %1767 = vmatpush1.msra.mxu0 0.0
    %1768 = vmatprep.subr.mxu0 0.0
    %1769 = vmatpush1.msra.mxu0 0.0
    %1770 = vmatprep.subr.mxu0 0.0
    %1771 = vmatpush1.msra.mxu0 0.0
    %1772 = vmatprep.subr.mxu0 0.0
    %1773 = vmatpush1.msra.mxu0 0.0
    %1774 = vmatprep.subr.mxu0 0.0
    %1775 = vmatpush1.msra.mxu0 0.0
    %1776 = vmatprep.subr.mxu0 0.0
    %1777 = vmatpush1.msra.mxu0 0.0
    %1778 = vmatprep.subr.mxu0 0.0
    %1779 = vmatpush1.msra.mxu0 0.0
    %1780 = vmatprep.subr.mxu0 0.0
    %1781 = vmatpush1.msra.mxu0 0.0
    %1782 = vmatprep.subr.mxu0 0.0
    %1783 = vmatpush1.msra.mxu0 %v60
    %1784 = vmatprep.subr.mxu0 0.0
    %1785 = vmatpush1.msra.mxu0 %v59
    %1786 = vmatprep.subr.mxu0 0.0
    %1787 = vmatpush1.msra.mxu0 %v58
    %1788 = vmatprep.subr.mxu0 0.0
    %1789 = vmatpush1.msra.mxu0 %v57
    %1790 = vmatprep.subr.mxu0 0.0
    %1791 = vmatpush2.msra.mxu0 0.0
    %1792 = vmatprep.subr.mxu0 0.0
    %1793 = vmatpush2.msra.mxu0 0.0
    %1794 = vmatprep.subr.mxu0 0.0
    %1795 = vmatpush2.msra.mxu0 0.0
    %1796 = vmatprep.subr.mxu0 0.0
    %1797 = vmatpush2.msra.mxu0 0.0
    %1798 = vmatprep.subr.mxu0 0.0
    %1799 = vmatpush2.msra.mxu0 0.0
    %1800 = vmatprep.subr.mxu0 0.0
    %1801 = vmatpush2.msra.mxu0 0.0
    %1802 = vmatprep.subr.mxu0 0.0
    %1803 = vmatpush2.msra.mxu0 0.0
    %1804 = vmatprep.subr.mxu0 0.0
    %1805 = vmatpush2.msra.mxu0 0.0
    %1806 = vmatprep.subr.mxu0 0.0
    %1807 = vmatpush2.msra.mxu0 0.0
    %1808 = vmatprep.subr.mxu0 0.0
    %1809 = vmatpush2.msra.mxu0 0.0
    %1810 = vmatprep.subr.mxu0 0.0
    %1811 = vmatpush2.msra.mxu0 0.0
    %1812 = vmatprep.subr.mxu0 0.0
    %1813 = vmatpush2.msra.mxu0 0.0
    %1814 = vmatprep.subr.mxu0 0.0
    %1815 = vmatpush2.msra.mxu0 0.0
    %1816 = vmatprep.subr.mxu0 0.0
    %1817 = vmatpush2.msra.mxu0 0.0
    %1818 = vmatprep.subr.mxu0 0.0
    %1819 = vmatpush2.msra.mxu0 0.0
    %1820 = vmatprep.subr.mxu0 0.0
    %1821 = vmatpush2.msra.mxu0 0.0
    %1822 = vmatprep.mubr.f32.mxu0 0.0
    %1823 = vmatmul.mubr.f32.gmra.mxu0 %v1756
    %v1824 = vpop.f32.mrf.mxu0
    %v1825 = vadd.f32 %v237, %v1824
    %v1826 = vpop.f32.mrf.mxu0
    %1827 = vdwg.mxu0
    %v1828 = vmin.f32 %v1825, 20.0
    %v1829 = vmul.f32 %v1828, 1.442695
    %v1830 = vpow.pop %v1829
    %v1831 = vadd.f32 %v1830, 1.0
    %v1832 = vmul.f32 %v1831, %v1831
    %v1833 = vsub.f32 %v1832, 1.0
    %v1834 = vmul.f32 %v1825, %v1833
    %v1835 = vadd.f32 %v1832, 1.0
    %v1836 = vrcp.pop %v1835
    %v1837 = vmul.f32 %v1834, %v1836
    %v1839 = vsel %vm238, %v1837, 0
    %1841 = vmatprep.subr.mxu0 0.0
    %1842 = vmatpush1.msra.mxu0 0.0
    %1843 = vmatprep.subr.mxu0 0.0
    %1844 = vmatpush1.msra.mxu0 0.0
    %1845 = vmatprep.subr.mxu0 0.0
    %1846 = vmatpush1.msra.mxu0 0.0
    %1847 = vmatprep.subr.mxu0 0.0
    %1848 = vmatpush1.msra.mxu0 0.0
    %1849 = vmatprep.subr.mxu0 0.0
    %1850 = vmatpush1.msra.mxu0 0.0
    %1851 = vmatprep.subr.mxu0 0.0
    %1852 = vmatpush1.msra.mxu0 0.0
    %1853 = vmatprep.subr.mxu0 0.0
    %1854 = vmatpush1.msra.mxu0 0.0
    %1855 = vmatprep.subr.mxu0 0.0
    %1856 = vmatpush1.msra.mxu0 0.0
    %1857 = vmatprep.subr.mxu0 0.0
    %1858 = vmatpush1.msra.mxu0 0.0
    %1859 = vmatprep.subr.mxu0 0.0
    %1860 = vmatpush1.msra.mxu0 0.0
    %1861 = vmatprep.subr.mxu0 0.0
    %1862 = vmatpush1.msra.mxu0 0.0
    %1863 = vmatprep.subr.mxu0 0.0
    %1864 = vmatpush1.msra.mxu0 0.0
    %1865 = vmatprep.subr.mxu0 0.0
    %1866 = vmatpush1.msra.mxu0 %v64
    %1867 = vmatprep.subr.mxu0 0.0
    %1868 = vmatpush1.msra.mxu0 %v63
    %1869 = vmatprep.subr.mxu0 0.0
    %1870 = vmatpush1.msra.mxu0 %v62
    %1871 = vmatprep.subr.mxu0 0.0
    %1872 = vmatpush1.msra.mxu0 %v61
    %1873 = vmatprep.subr.mxu0 0.0
    %1874 = vmatpush2.msra.mxu0 0.0
    %1875 = vmatprep.subr.mxu0 0.0
    %1876 = vmatpush2.msra.mxu0 0.0
    %1877 = vmatprep.subr.mxu0 0.0
    %1878 = vmatpush2.msra.mxu0 0.0
    %1879 = vmatprep.subr.mxu0 0.0
    %1880 = vmatpush2.msra.mxu0 0.0
    %1881 = vmatprep.subr.mxu0 0.0
    %1882 = vmatpush2.msra.mxu0 0.0
    %1883 = vmatprep.subr.mxu0 0.0
    %1884 = vmatpush2.msra.mxu0 0.0
    %1885 = vmatprep.subr.mxu0 0.0
    %1886 = vmatpush2.msra.mxu0 0.0
    %1887 = vmatprep.subr.mxu0 0.0
    %1888 = vmatpush2.msra.mxu0 0.0
    %1889 = vmatprep.subr.mxu0 0.0
    %1890 = vmatpush2.msra.mxu0 0.0
    %1891 = vmatprep.subr.mxu0 0.0
    %1892 = vmatpush2.msra.mxu0 0.0
    %1893 = vmatprep.subr.mxu0 0.0
    %1894 = vmatpush2.msra.mxu0 0.0
    %1895 = vmatprep.subr.mxu0 0.0
    %1896 = vmatpush2.msra.mxu0 0.0
    %1897 = vmatprep.subr.mxu0 0.0
    %1898 = vmatpush2.msra.mxu0 0.0
    %1899 = vmatprep.subr.mxu0 0.0
    %1900 = vmatpush2.msra.mxu0 0.0
    %1901 = vmatprep.subr.mxu0 0.0
    %1902 = vmatpush2.msra.mxu0 0.0
    %1903 = vmatprep.subr.mxu0 0.0
    %1904 = vmatpush2.msra.mxu0 0.0
    %1905 = vmatprep.mubr.f32.mxu0 0.0
    %1906 = vmatmul.mubr.f32.gmra.mxu0 %v1839
    %v1907 = vpop.f32.mrf.mxu0
    %v1908 = vadd.f32 %v325, %v1907
    %v1909 = vpop.f32.mrf.mxu0
    %1910 = vdwg.mxu0
    %v1911 = vmul.f32 %v1665, 0.0014456538
    %v1912 = vmul.f32 %v1908, 0.49956253
    %v1913 = vadd.f32 %v1911, %v1912
    %s1914 = scalar_lea.vmem [#allocation5], 56
    %v1915 = vld [vmem:[%s1914] sm:$0xff]
    %v1916 = vmul.f32 %v1915, 1.999999
    %v1917 = vadd.f32 %v1913, %v1916
    %v1918 = vld [vmem:[#allocation7 + $0x6f] sm:$0x1]
    %v1920 = vsel %vm145, %v1917, 0
    %1922 = vmatprep.subr.mxu0 0.0
    %1923 = vmatpush1.msra.mxu0 0.0
    %1924 = vmatprep.subr.mxu0 0.0
    %1925 = vmatpush1.msra.mxu0 0.0
    %1926 = vmatprep.subr.mxu0 0.0
    %1927 = vmatpush1.msra.mxu0 0.0
    %1928 = vmatprep.subr.mxu0 0.0
    %1929 = vmatpush1.msra.mxu0 0.0
    %1930 = vmatprep.subr.mxu0 0.0
    %1931 = vmatpush1.msra.mxu0 0.0
    %1932 = vmatprep.subr.mxu0 0.0
    %1933 = vmatpush1.msra.mxu0 0.0
    %1934 = vmatprep.subr.mxu0 0.0
    %1935 = vmatpush1.msra.mxu0 0.0
    %1936 = vmatprep.subr.mxu0 0.0
    %1937 = vmatpush1.msra.mxu0 0.0
    %1938 = vmatprep.subr.mxu0 0.0
    %1939 = vmatpush1.msra.mxu0 0.0
    %1940 = vmatprep.subr.mxu0 0.0
    %1941 = vmatpush1.msra.mxu0 0.0
    %1942 = vmatprep.subr.mxu0 0.0
    %1943 = vmatpush1.msra.mxu0 0.0
    %1944 = vmatprep.subr.mxu0 0.0
    %1945 = vmatpush1.msra.mxu0 0.0
    %1946 = vmatprep.subr.mxu0 0.0
    %1947 = vmatpush1.msra.mxu0 0.0
    %1948 = vmatprep.subr.mxu0 0.0
    %1949 = vmatpush1.msra.mxu0 0.0
    %1950 = vmatprep.subr.mxu0 0.0
    %1951 = vmatpush1.msra.mxu0 0.0
    %1952 = vmatprep.subr.mxu0 0.0
    %1953 = vmatpush1.msra.mxu0 %v54
    %1954 = vmatprep.subr.mxu0 0.0
    %1955 = vmatpush2.msra.mxu0 0.0
    %1956 = vmatprep.subr.mxu0 0.0
    %1957 = vmatpush2.msra.mxu0 0.0
    %1958 = vmatprep.subr.mxu0 0.0
    %1959 = vmatpush2.msra.mxu0 0.0
    %1960 = vmatprep.subr.mxu0 0.0
    %1961 = vmatpush2.msra.mxu0 0.0
    %1962 = vmatprep.subr.mxu0 0.0
    %1963 = vmatpush2.msra.mxu0 0.0
    %1964 = vmatprep.subr.mxu0 0.0
    %1965 = vmatpush2.msra.mxu0 0.0
    %1966 = vmatprep.subr.mxu0 0.0
    %1967 = vmatpush2.msra.mxu0 0.0
    %1968 = vmatprep.subr.mxu0 0.0
    %1969 = vmatpush2.msra.mxu0 0.0
    %1970 = vmatprep.subr.mxu0 0.0
    %1971 = vmatpush2.msra.mxu0 0.0
    %1972 = vmatprep.subr.mxu0 0.0
    %1973 = vmatpush2.msra.mxu0 0.0
    %1974 = vmatprep.subr.mxu0 0.0
    %1975 = vmatpush2.msra.mxu0 0.0
    %1976 = vmatprep.subr.mxu0 0.0
    %1977 = vmatpush2.msra.mxu0 0.0
    %1978 = vmatprep.subr.mxu0 0.0
    %1979 = vmatpush2.msra.mxu0 0.0
    %1980 = vmatprep.subr.mxu0 0.0
    %1981 = vmatpush2.msra.mxu0 0.0
    %1982 = vmatprep.subr.mxu0 0.0
    %1983 = vmatpush2.msra.mxu0 0.0
    %1984 = vmatprep.subr.mxu0 0.0
    %1985 = vmatpush2.msra.mxu0 0.0
    %1986 = vmatprep.mubr.f32.mxu0 0.0
    %1987 = vmatmul.mubr.f32.gmra.mxu0 %v1920
    %v1988 = vpop.f32.mrf.mxu0
    %v1989 = vadd.f32 %v139, %v1988
    %v1990 = vpop.f32.mrf.mxu0
    %1991 = vdwg.mxu0
    %v1992 = vlaneseq
    %v1993 = vshrl.u32 %v1992, 7
    %v1994 = vsub.s32 0, %v1993
    %v1995 = vrot.slane %v1918, %v1994
    %v1996 = vadd.f32 %v1989, %v1995
    %v1997 = vmin.f32 %v1996, 20.0
    %v1998 = vmul.f32 %v1997, 1.442695
    %v1999 = vpow.pop %v1998
    %v2000 = vadd.f32 %v1999, 1.0
    %v2001 = vmul.f32 %v2000, %v2000
    %v2002 = vsub.f32 %v2001, 1.0
    %v2003 = vmul.f32 %v1996, %v2002
    %v2004 = vadd.f32 %v2001, 1.0
    %v2005 = vrcp.pop %v2004
    %v2006 = vmul.f32 %v2003, %v2005
    %v2008 = vsel %vm238, %v2006, 0
    %2010 = vmatprep.subr.mxu0 0.0
    %2011 = vmatpush1.msra.mxu0 0.0
    %2012 = vmatprep.subr.mxu0 0.0
    %2013 = vmatpush1.msra.mxu0 0.0
    %2014 = vmatprep.subr.mxu0 0.0
    %2015 = vmatpush1.msra.mxu0 0.0
    %2016 = vmatprep.subr.mxu0 0.0
    %2017 = vmatpush1.msra.mxu0 0.0
    %2018 = vmatprep.subr.mxu0 0.0
    %2019 = vmatpush1.msra.mxu0 0.0
    %2020 = vmatprep.subr.mxu0 0.0
    %2021 = vmatpush1.msra.mxu0 0.0
    %2022 = vmatprep.subr.mxu0 0.0
    %2023 = vmatpush1.msra.mxu0 0.0
    %2024 = vmatprep.subr.mxu0 0.0
    %2025 = vmatpush1.msra.mxu0 0.0
    %2026 = vmatprep.subr.mxu0 0.0
    %2027 = vmatpush1.msra.mxu0 0.0
    %2028 = vmatprep.subr.mxu0 0.0
    %2029 = vmatpush1.msra.mxu0 0.0
    %2030 = vmatprep.subr.mxu0 0.0
    %2031 = vmatpush1.msra.mxu0 0.0
    %2032 = vmatprep.subr.mxu0 0.0
    %2033 = vmatpush1.msra.mxu0 0.0
    %2034 = vmatprep.subr.mxu0 0.0
    %2035 = vmatpush1.msra.mxu0 %v60
    %2036 = vmatprep.subr.mxu0 0.0
    %2037 = vmatpush1.msra.mxu0 %v59
    %2038 = vmatprep.subr.mxu0 0.0
    %2039 = vmatpush1.msra.mxu0 %v58
    %2040 = vmatprep.subr.mxu0 0.0
    %2041 = vmatpush1.msra.mxu0 %v57
    %2042 = vmatprep.subr.mxu0 0.0
    %2043 = vmatpush2.msra.mxu0 0.0
    %2044 = vmatprep.subr.mxu0 0.0
    %2045 = vmatpush2.msra.mxu0 0.0
    %2046 = vmatprep.subr.mxu0 0.0
    %2047 = vmatpush2.msra.mxu0 0.0
    %2048 = vmatprep.subr.mxu0 0.0
    %2049 = vmatpush2.msra.mxu0 0.0
    %2050 = vmatprep.subr.mxu0 0.0
    %2051 = vmatpush2.msra.mxu0 0.0
    %2052 = vmatprep.subr.mxu0 0.0
    %2053 = vmatpush2.msra.mxu0 0.0
    %2054 = vmatprep.subr.mxu0 0.0
    %2055 = vmatpush2.msra.mxu0 0.0
    %2056 = vmatprep.subr.mxu0 0.0
    %2057 = vmatpush2.msra.mxu0 0.0
    %2058 = vmatprep.subr.mxu0 0.0
    %2059 = vmatpush2.msra.mxu0 0.0
    %2060 = vmatprep.subr.mxu0 0.0
    %2061 = vmatpush2.msra.mxu0 0.0
    %2062 = vmatprep.subr.mxu0 0.0
    %2063 = vmatpush2.msra.mxu0 0.0
    %2064 = vmatprep.subr.mxu0 0.0
    %2065 = vmatpush2.msra.mxu0 0.0
    %2066 = vmatprep.subr.mxu0 0.0
    %2067 = vmatpush2.msra.mxu0 0.0
    %2068 = vmatprep.subr.mxu0 0.0
    %2069 = vmatpush2.msra.mxu0 0.0
    %2070 = vmatprep.subr.mxu0 0.0
    %2071 = vmatpush2.msra.mxu0 0.0
    %2072 = vmatprep.subr.mxu0 0.0
    %2073 = vmatpush2.msra.mxu0 0.0
    %2074 = vmatprep.mubr.f32.mxu0 0.0
    %2075 = vmatmul.mubr.f32.gmra.mxu0 %v2008
    %v2076 = vpop.f32.mrf.mxu0
    %v2077 = vadd.f32 %v237, %v2076
    %v2078 = vpop.f32.mrf.mxu0
    %2079 = vdwg.mxu0
    %v2080 = vmin.f32 %v2077, 20.0
    %v2081 = vmul.f32 %v2080, 1.442695
    %v2082 = vpow.pop %v2081
    %v2083 = vadd.f32 %v2082, 1.0
    %v2084 = vmul.f32 %v2083, %v2083
    %v2085 = vsub.f32 %v2084, 1.0
    %v2086 = vmul.f32 %v2077, %v2085
    %v2087 = vadd.f32 %v2084, 1.0
    %v2088 = vrcp.pop %v2087
    %v2089 = vmul.f32 %v2086, %v2088
    %v2091 = vsel %vm238, %v2089, 0
    %2093 = vmatprep.subr.mxu0 0.0
    %2094 = vmatpush1.msra.mxu0 0.0
    %2095 = vmatprep.subr.mxu0 0.0
    %2096 = vmatpush1.msra.mxu0 0.0
    %2097 = vmatprep.subr.mxu0 0.0
    %2098 = vmatpush1.msra.mxu0 0.0
    %2099 = vmatprep.subr.mxu0 0.0
    %2100 = vmatpush1.msra.mxu0 0.0
    %2101 = vmatprep.subr.mxu0 0.0
    %2102 = vmatpush1.msra.mxu0 0.0
    %2103 = vmatprep.subr.mxu0 0.0
    %2104 = vmatpush1.msra.mxu0 0.0
    %2105 = vmatprep.subr.mxu0 0.0
    %2106 = vmatpush1.msra.mxu0 0.0
    %2107 = vmatprep.subr.mxu0 0.0
    %2108 = vmatpush1.msra.mxu0 0.0
    %2109 = vmatprep.subr.mxu0 0.0
    %2110 = vmatpush1.msra.mxu0 0.0
    %2111 = vmatprep.subr.mxu0 0.0
    %2112 = vmatpush1.msra.mxu0 0.0
    %2113 = vmatprep.subr.mxu0 0.0
    %2114 = vmatpush1.msra.mxu0 0.0
    %2115 = vmatprep.subr.mxu0 0.0
    %2116 = vmatpush1.msra.mxu0 0.0
    %2117 = vmatprep.subr.mxu0 0.0
    %2118 = vmatpush1.msra.mxu0 %v64
    %2119 = vmatprep.subr.mxu0 0.0
    %2120 = vmatpush1.msra.mxu0 %v63
    %2121 = vmatprep.subr.mxu0 0.0
    %2122 = vmatpush1.msra.mxu0 %v62
    %2123 = vmatprep.subr.mxu0 0.0
    %2124 = vmatpush1.msra.mxu0 %v61
    %2125 = vmatprep.subr.mxu0 0.0
    %2126 = vmatpush2.msra.mxu0 0.0
    %2127 = vmatprep.subr.mxu0 0.0
    %2128 = vmatpush2.msra.mxu0 0.0
    %2129 = vmatprep.subr.mxu0 0.0
    %2130 = vmatpush2.msra.mxu0 0.0
    %2131 = vmatprep.subr.mxu0 0.0
    %2132 = vmatpush2.msra.mxu0 0.0
    %2133 = vmatprep.subr.mxu0 0.0
    %2134 = vmatpush2.msra.mxu0 0.0
    %2135 = vmatprep.subr.mxu0 0.0
    %2136 = vmatpush2.msra.mxu0 0.0
    %2137 = vmatprep.subr.mxu0 0.0
    %2138 = vmatpush2.msra.mxu0 0.0
    %2139 = vmatprep.subr.mxu0 0.0
    %2140 = vmatpush2.msra.mxu0 0.0
    %2141 = vmatprep.subr.mxu0 0.0
    %2142 = vmatpush2.msra.mxu0 0.0
    %2143 = vmatprep.subr.mxu0 0.0
    %2144 = vmatpush2.msra.mxu0 0.0
    %2145 = vmatprep.subr.mxu0 0.0
    %2146 = vmatpush2.msra.mxu0 0.0
    %2147 = vmatprep.subr.mxu0 0.0
    %2148 = vmatpush2.msra.mxu0 0.0
    %2149 = vmatprep.subr.mxu0 0.0
    %2150 = vmatpush2.msra.mxu0 0.0
    %2151 = vmatprep.subr.mxu0 0.0
    %2152 = vmatpush2.msra.mxu0 0.0
    %2153 = vmatprep.subr.mxu0 0.0
    %2154 = vmatpush2.msra.mxu0 0.0
    %2155 = vmatprep.subr.mxu0 0.0
    %2156 = vmatpush2.msra.mxu0 0.0
    %2157 = vmatprep.mubr.f32.mxu0 0.0
    %2158 = vmatmul.mubr.f32.gmra.mxu0 %v2091
    %v2159 = vpop.f32.mrf.mxu0
    %v2160 = vadd.f32 %v325, %v2159
    %v2161 = vpop.f32.mrf.mxu0
    %2162 = vdwg.mxu0
    %v2163 = vmul.f32 %v1917, 0.05893441
    %v2164 = vmul.f32 %v2160, 0.48458618
    %v2165 = vadd.f32 %v2163, %v2164
    %v2166 = vmax.f32 %v2165, -1.0
    %v2167 = vmin.f32 %v2166, 1.0
    %2168 = vst.msk [vmem:[#allocation8] sm:$0xff] %vm145, %v2167
    // Predicated region
    $region26: #{consistency_forward.1} parent=1 // pred_check
      _
    $region27: #{consistency_forward.1} parent=1 // pred_check_branch
      %2170 = sbr.rel (0) target = $region29
    $region28: #{consistency_forward.1} parent=1 // pred_region
      %s2172 = ssub.s32 128, 128
      %2173 = vsyncadd [#allocation4], %s2172
      %s2175 = sshll.u32 [#allocation8], 4
      %s2176 = int_to_ptr.vmem [resolvable:$true] %s2175
      %2178 = dma.vmem_to_hbm [thread:$0]  %s2176, 128, %s3, [#allocation4]
    $region29: #{consistency_forward.1} parent=1 // pred_fallthru
      _
    // Predicated region
    $region30: #{consistency_forward.1} parent=1 // pred_check
      _
    $region31: #{consistency_forward.1} parent=1 // pred_check_branch
      %2180 = sbr.rel (0) target = $region33
    $region32: #{consistency_forward.1} parent=1 // pred_region
      %2181 = dma.done [#allocation4], 128
    $region33: #{consistency_forward.1} parent=1 // pred_fallthru
      _
    %2182 = vsyncpa [#allocation3], 1
    %2183 = vsyncpa [#allocation6], 1
    %2184 = vsyncpa [#allocation4], 1

</llo_original>
